<compile_context>
chip_gen: v6e
topology: v6e:2x2x1
jax: 0.10.0
libtpu: 0.0.40
codegen_flags: <defaults>
</compile_context>

<pallas_src>
import numpy as np

import jax
import jax.numpy as jnp
from jax.experimental import pallas as pl
from jax.experimental.pallas import tpu as pltpu

IN_DIM = 32
MEM_DIM = 32
PACK = 4 * MEM_DIM  # 128 lanes: matmul output [i|o|u|f], state row [c|h|pad]


def _round_up(x, m):
    return (x + m - 1) // m * m


# ----------------------------------------------------------------------------
# Kernel: single grid step; fori_loop over nodes in post-order inside.
# ----------------------------------------------------------------------------
def _tree_lstm_kernel(parent_ref,                       # SMEM prefetch: (num_nodes,)
                      x_ref, wx_ref, wh_ref, b_ref,     # resident VMEM inputs
                      out_ref,                          # (S, 128) packed [c|h|0|0]
                      px_ref, acc_ref):                 # VMEM scratch, (S, 128) each
    m = MEM_DIM
    num_nodes = parent_ref.shape[0]

    # ---- phase 1: batched input projection, ONE fat MXU matmul --------------
    # px[s] = x_slot[s] @ [Wioux | Wfx] + [bioux+biouh | bfx+bfh]
    px_ref[...] = (jnp.dot(x_ref[...], wx_ref[...],
                           preferred_element_type=jnp.float32) + b_ref[...])
    # acc[s] accumulates [ sum_k h_k @ Wiouh (96 lanes) | sum_k f_k*c_k (32) ]
    acc_ref[...] = jnp.zeros_like(acc_ref)
    out_ref[...] = jnp.zeros_like(out_ref)

    # ---- phase 2: sequential post-order walk (true data dependence) ---------
    def body(n, carry):
        a = acc_ref[pl.ds(n, 1), :]                       # (1, 128)
        p = px_ref[pl.ds(n, 1), :]                        # (1, 128)

        iou = p[:, 0:3 * m] + a[:, 0:3 * m]               # (1, 96)
        i = jax.nn.sigmoid(iou[:, 0:m])
        o = jax.nn.sigmoid(iou[:, m:2 * m])
        u = jnp.tanh(iou[:, 2 * m:3 * m])
        c = i * u + a[:, 3 * m:4 * m]                     # + sum_k f_k * c_k
        h = o * jnp.tanh(c)

        out_ref[pl.ds(n, 1), :] = jnp.concatenate(
            [c, h, jnp.zeros((1, 2 * m), jnp.float32)], axis=1)

        # Scatter this node's contribution into its parent's accumulator row.
        # The root is the last post-order node and has no parent -> skip.
        @pl.when(n < num_nodes - 1)
        def _():
            par = parent_ref[n]
            ph = jnp.dot(h, wh_ref[...],
                         preferred_element_type=jnp.float32)              # (1, 128)
            pxp = px_ref[pl.ds(par, 1), :]                                 # parent's px
            f = jax.nn.sigmoid(ph[:, 3 * m:4 * m] + pxp[:, 3 * m:4 * m])   # (1, mem)
            contrib = jnp.concatenate([ph[:, 0:3 * m], f * c], axis=1)     # (1, 128)
            acc_ref[pl.ds(par, 1), :] = acc_ref[pl.ds(par, 1), :] + contrib

        return carry

    jax.lax.fori_loop(0, num_nodes, body, 0, unroll=(num_nodes <= 64))


@jax.jit
def _run_tree(parent_slot, x_slot, w_x, w_h, b_all):
    num_slots = x_slot.shape[0]

    grid_spec = pltpu.PrefetchScalarGridSpec(
        num_scalar_prefetch=1,
        grid=(1,),
        in_specs=[
            # everything resident in VMEM for the whole (single-step) call
            pl.BlockSpec(x_slot.shape, lambda i, par: (0, 0)),
            pl.BlockSpec(w_x.shape, lambda i, par: (0, 0)),
            pl.BlockSpec(w_h.shape, lambda i, par: (0, 0)),
            pl.BlockSpec(b_all.shape, lambda i, par: (0, 0)),
        ],
        out_specs=pl.BlockSpec((num_slots, PACK), lambda i, par: (0, 0)),
        scratch_shapes=[
            pltpu.VMEM((num_slots, PACK), jnp.float32),   # px   (input projections)
            pltpu.VMEM((num_slots, PACK), jnp.float32),   # acc  (child contributions)
        ],
    )
    return pl.pallas_call(
        _tree_lstm_kernel,
        grid_spec=grid_spec,
        out_shape=jax.ShapeDtypeStruct((num_slots, PACK), jnp.float32),
        compiler_params=pltpu.CompilerParams(
            dimension_semantics=("arbitrary",)),
    )(parent_slot, x_slot, w_x, w_h, b_all)


# ----------------------------------------------------------------------------
# Host-side glue: parameters, tree structure, forward.
# ----------------------------------------------------------------------------
def init_params(key, in_dim, mem_dim):
    """Deterministic nn.Linear-style init; weights stored (in, out)."""
    def linear(key, fan_in, fan_out):
        kw, kb = jax.random.split(key)
        bound = 1.0 / jnp.sqrt(float(fan_in))
        w = jax.random.uniform(kw, (fan_in, fan_out), jnp.float32, -bound, bound)
        b = jax.random.uniform(kb, (1, fan_out), jnp.float32, -bound, bound)
        return w, b

    k1, k2, k3, k4 = jax.random.split(key, 4)
    wioux, bioux = linear(k1, in_dim, 3 * mem_dim)   # self.ioux
    wiouh, biouh = linear(k2, mem_dim, 3 * mem_dim)  # self.iouh
    wfx, bfx = linear(k3, in_dim, mem_dim)           # self.fx
    wfh, bfh = linear(k4, mem_dim, mem_dim)          # self.fh
    return (wioux, bioux, wiouh, biouh, wfx, bfx, wfh, bfh)


def pack_params(params):
    """Fuse the four Linear layers into two lane-dense matmuls + one bias."""
    wioux, bioux, wiouh, biouh, wfx, bfx, wfh, bfh = params
    w_x = jnp.concatenate([wioux, wfx], axis=1)                    # (in_dim , 128)
    w_h = jnp.concatenate([wiouh, wfh], axis=1)                    # (mem_dim, 128)
    b_all = jnp.concatenate([bioux + biouh, bfx + bfh], axis=1)    # (1, 128)
    return w_x, w_h, b_all


class Tree:
    def __init__(self, idx, children=()):
        self.idx = idx
        self.children = list(children)
        self.num_children = len(self.children)
        self.state = None


def _flatten_postorder(tree):
    order = []

    def rec(node):
        for ch in node.children:
            rec(ch)
        order.append(node)

    rec(tree)
    return order


def tree_lstm_forward(tree, inputs, params):
    """ChildSumTreeLSTM forward over a whole tree with one pallas_call."""
    w_x, w_h, b_all = pack_params(params)

    nodes = _flatten_postorder(tree)
    num_nodes = len(nodes)
    slot_of = {id(n): s for s, n in enumerate(nodes)}

    # Per-slot topology: parent slot of each node (root -> dummy slot, unused).
    parent_slot = np.full((num_nodes,), num_nodes, np.int32)
    input_idx = np.zeros((num_nodes,), np.int32)
    for s, node in enumerate(nodes):
        input_idx[s] = node.idx
        for ch in node.children:
            parent_slot[slot_of[id(ch)]] = s

    # Inputs permuted into slot (post-order) order, padded to a sublane multiple
    # (+1 dummy row so the accumulator slab has a safe scatter target).
    num_slots = _round_up(num_nodes + 1, 8)
    x_np = np.asarray(inputs, np.float32)
    x_slot = np.zeros((num_slots, x_np.shape[1]), np.float32)
    x_slot[:num_nodes] = x_np[input_idx]

    state = _run_tree(jnp.asarray(parent_slot), jnp.asarray(x_slot),
                      w_x, w_h, b_all)

    # Attach states back to the tree nodes (mirrors `tree.state = ...`).
    for s, node in enumerate(nodes):
        row = state[s]
        node.state = (row[None, 0:MEM_DIM], row[None, MEM_DIM:2 * MEM_DIM])
    return tree.state


# ----------------------------------------------------------------------------
# Pure-JAX reference (mirrors the PyTorch node_forward) for verification.
# ----------------------------------------------------------------------------
def node_forward_ref(x, child_c, child_h, params):
    (wioux, bioux, wiouh, biouh, wfx, bfx, wfh, bfh) = params
    child_h_sum = jnp.sum(child_h, axis=0, keepdims=True)
    iou = x @ wioux + bioux + child_h_sum @ wiouh + biouh
    i, o, u = jnp.split(iou, 3, axis=1)
    i, o, u = jax.nn.sigmoid(i), jax.nn.sigmoid(o), jnp.tanh(u)
    f = jax.nn.sigmoid(child_h @ wfh + bfh + (x @ wfx + bfx))
    fc = f * child_c
    c = i * u + jnp.sum(fc, axis=0, keepdims=True)
    h = o * jnp.tanh(c)
    return c, h


def tree_lstm_forward_ref(tree, inputs, params):
    states = {}

    def rec(node):
        for ch in node.children:
            rec(ch)
        if node.num_children == 0:
            child_c = jnp.zeros((1, MEM_DIM), jnp.float32)
            child_h = jnp.zeros((1, MEM_DIM), jnp.float32)
        else:
            child_c = jnp.concatenate([states[id(c)][0] for c in node.children], 0)
            child_h = jnp.concatenate([states[id(c)][1] for c in node.children], 0)
        states[id(node)] = node_forward_ref(inputs[node.idx][None, :],
                                            child_c, child_h, params)

    rec(tree)
    return states[id(tree)]


if __name__ == "__main__":
    key = jax.random.PRNGKey(0)
    kp, kx = jax.random.split(key)

    params = init_params(kp, IN_DIM, MEM_DIM)

    # A small deterministic tree over 6 token positions:
    #        root(idx=5)
    #        /         \
    #   n(idx=2)      n(idx=4)
    #   /     \          |
    # leaf(0) leaf(1)  leaf(3)
    tree = Tree(5, [
        Tree(2, [Tree(0), Tree(1)]),
        Tree(4, [Tree(3)]),
    ])

    seq_len = 6
    inputs = jax.random.normal(kx, (seq_len, IN_DIM), jnp.float32)

    c, h = tree_lstm_forward(tree, inputs, params)
    jax.block_until_ready((c, h))

    c_ref, h_ref = tree_lstm_forward_ref(tree, inputs, params)
    assert jnp.allclose(c, c_ref, atol=1e-5, rtol=1e-5), (c, c_ref)
    assert jnp.allclose(h, h_ref, atol=1e-5, rtol=1e-5), (h, h_ref)

    print("KERNEL_OK")
</pallas_src>

<mosaic_0001>
module attributes {stable_mosaic.version = 11 : i64} {
  func.func @_tree_lstm_kernel(%arg0: i32, %arg1: memref<6xi32, #tpu.memory_space<smem>>, %arg2: memref<8x32xf32, #tpu.memory_space<vmem>>, %arg3: memref<32x128xf32, #tpu.memory_space<vmem>>, %arg4: memref<32x128xf32, #tpu.memory_space<vmem>>, %arg5: memref<1x128xf32, #tpu.memory_space<vmem>>, %arg6: memref<8x128xf32, #tpu.memory_space<vmem>>, %arg7: memref<8x128xf32, #tpu.memory_space<vmem>>, %arg8: memref<8x128xf32, #tpu.memory_space<vmem>>) attributes {dimension_semantics = [#tpu.dimension_semantics<arbitrary>], iteration_bounds = array<i64: 1>, scalar_prefetch = 1 : i64, scratch_operands = 2 : i64, tpu.core_type = #tpu.core_type<tc>, window_params = [{pipeline_mode = #tpu.pipeline_mode<synchronous>, transform_indices = @transform_0, window_bounds = array<i64: 8, 32>}, {pipeline_mode = #tpu.pipeline_mode<synchronous>, transform_indices = @transform_1, window_bounds = array<i64: 32, 128>}, {pipeline_mode = #tpu.pipeline_mode<synchronous>, transform_indices = @transform_2, window_bounds = array<i64: 32, 128>}, {pipeline_mode = #tpu.pipeline_mode<synchronous>, transform_indices = @transform_3, window_bounds = array<i64: 1, 128>}, {pipeline_mode = #tpu.pipeline_mode<synchronous>, transform_indices = @transform_4, window_bounds = array<i64: 8, 128>}]} {
    %c0 = arith.constant 0 : index
    %c0_0 = arith.constant 0 : index
    %0 = vector.load %arg2[%c0, %c0_0] : memref<8x32xf32, #tpu.memory_space<vmem>>, vector<8x32xf32>
    %c0_1 = arith.constant 0 : index
    %c0_2 = arith.constant 0 : index
    %1 = vector.load %arg3[%c0_1, %c0_2] : memref<32x128xf32, #tpu.memory_space<vmem>>, vector<32x128xf32>
    %cst = arith.constant dense<0.000000e+00> : vector<8x128xf32>
    %2 = tpu.matmul %0, %1, %cst {dimension_numbers = #tpu.dot_dimension_numbers<[1], [0], [0], [1], [0, 0, 1, 1], [], []>} : vector<8x32xf32>, vector<32x128xf32>, vector<8x128xf32> -> vector<8x128xf32>
    %c0_3 = arith.constant 0 : index
    %c0_4 = arith.constant 0 : index
    %3 = vector.load %arg5[%c0_3, %c0_4] : memref<1x128xf32, #tpu.memory_space<vmem>>, vector<1x128xf32>
    %4 = vector.broadcast %3 : vector<1x128xf32> to vector<8x128xf32>
    %5 = arith.addf %2, %4 : vector<8x128xf32>
    %c0_5 = arith.constant 0 : index
    %c0_6 = arith.constant 0 : index
    %6 = vector.load %arg7[%c0_5, %c0_6] : memref<8x128xf32, #tpu.memory_space<vmem>>, vector<8x128xf32>
    tpu.vector_store %arg7[%c0_5, %c0_6], %5 {strides = array<i32>} : memref<8x128xf32, #tpu.memory_space<vmem>>, vector<8x128xf32>,
    %cst_7 = arith.constant 0.000000e+00 : f32
    %7 = vector.broadcast %cst_7 : f32 to vector<8x128xf32>
    %c0_8 = arith.constant 0 : index
    %c0_9 = arith.constant 0 : index
    %8 = vector.load %arg8[%c0_8, %c0_9] : memref<8x128xf32, #tpu.memory_space<vmem>>, vector<8x128xf32>
    tpu.vector_store %arg8[%c0_8, %c0_9], %7 {strides = array<i32>} : memref<8x128xf32, #tpu.memory_space<vmem>>, vector<8x128xf32>,
    %cst_10 = arith.constant 0.000000e+00 : f32
    %9 = vector.broadcast %cst_10 : f32 to vector<8x128xf32>
    %c0_11 = arith.constant 0 : index
    %c0_12 = arith.constant 0 : index
    %10 = vector.load %arg6[%c0_11, %c0_12] : memref<8x128xf32, #tpu.memory_space<vmem>>, vector<8x128xf32>
    tpu.vector_store %arg6[%c0_11, %c0_12], %9 {strides = array<i32>} : memref<8x128xf32, #tpu.memory_space<vmem>>, vector<8x128xf32>,
    %c0_i32 = arith.constant 0 : i32
    %11 = arith.index_cast %c0_i32 : i32 to index
    %c0_13 = arith.constant 0 : index
    %12 = vector.load %arg8[%11, %c0_13] : memref<8x128xf32, #tpu.memory_space<vmem>>, vector<1x128xf32>
    %13 = arith.index_cast %c0_i32 : i32 to index
    %c0_14 = arith.constant 0 : index
    %14 = vector.load %arg7[%13, %c0_14] : memref<8x128xf32, #tpu.memory_space<vmem>>, vector<1x128xf32>
    %15 = vector.extract_strided_slice %14 {offsets = [0, 0], sizes = [1, 96], strides = [1, 1]} : vector<1x128xf32> to vector<1x96xf32>
    %16 = vector.extract_strided_slice %12 {offsets = [0, 0], sizes = [1, 96], strides = [1, 1]} : vector<1x128xf32> to vector<1x96xf32>
    %17 = arith.addf %15, %16 : vector<1x96xf32>
    %18 = vector.extract_strided_slice %17 {offsets = [0, 0], sizes = [1, 32], strides = [1, 1]} : vector<1x96xf32> to vector<1x32xf32>
    %19 = arith.negf %18 : vector<1x32xf32>
    %20 = math.exp %19 : vector<1x32xf32>
    %cst_15 = arith.constant 1.000000e+00 : f32
    %21 = vector.broadcast %cst_15 : f32 to vector<1x32xf32>
    %22 = arith.addf %21, %20 : vector<1x32xf32>
    %23 = arith.divf %21, %22 : vector<1x32xf32>
    %24 = vector.extract_strided_slice %17 {offsets = [0, 32], sizes = [1, 32], strides = [1, 1]} : vector<1x96xf32> to vector<1x32xf32>
    %25 = arith.negf %24 : vector<1x32xf32>
    %26 = math.exp %25 : vector<1x32xf32>
    %cst_16 = arith.constant 1.000000e+00 : f32
    %27 = vector.broadcast %cst_16 : f32 to vector<1x32xf32>
    %28 = arith.addf %27, %26 : vector<1x32xf32>
    %29 = arith.divf %27, %28 : vector<1x32xf32>
    %30 = vector.extract_strided_slice %17 {offsets = [0, 64], sizes = [1, 32], strides = [1, 1]} : vector<1x96xf32> to vector<1x32xf32>
    %31 = math.tanh %30 : vector<1x32xf32>
    %32 = arith.mulf %23, %31 : vector<1x32xf32>
    %33 = vector.extract_strided_slice %12 {offsets = [0, 96], sizes = [1, 32], strides = [1, 1]} : vector<1x128xf32> to vector<1x32xf32>
    %34 = arith.addf %32, %33 : vector<1x32xf32>
    %35 = math.tanh %34 : vector<1x32xf32>
    %36 = arith.mulf %29, %35 : vector<1x32xf32>
    %cst_17 = arith.constant 0.000000e+00 : f32
    %37 = vector.broadcast %cst_17 : f32 to vector<1x64xf32>
    %38 = tpu.concatenate %34, %36, %37 in 1 : vector<1x32xf32>, vector<1x32xf32>, vector<1x64xf32> -> vector<1x128xf32>
    %39 = arith.index_cast %c0_i32 : i32 to index
    %c0_18 = arith.constant 0 : index
    %40 = vector.load %arg6[%39, %c0_18] : memref<8x128xf32, #tpu.memory_space<vmem>>, vector<1x128xf32>
    tpu.vector_store %arg6[%39, %c0_18], %38 {strides = array<i32>} : memref<8x128xf32, #tpu.memory_space<vmem>>, vector<1x128xf32>,
    %c5_i32 = arith.constant 5 : i32
    %41 = arith.cmpi slt, %c0_i32, %c5_i32 : i32
    %42 = arith.extui %41 : i1 to i32
    %c0_i32_19 = arith.constant 0 : i32
    %43 = arith.cmpi ne, %42, %c0_i32_19 : i32
    scf.if %43 {
      %209 = arith.index_cast %c0_i32 : i32 to index
      %210 = memref.load %arg1[%209] : memref<6xi32, #tpu.memory_space<smem>>
      %c0_61 = arith.constant 0 : index
      %c0_62 = arith.constant 0 : index
      %211 = vector.load %arg4[%c0_61, %c0_62] : memref<32x128xf32, #tpu.memory_space<vmem>>, vector<32x128xf32>
      %cst_63 = arith.constant dense<0.000000e+00> : vector<1x128xf32>
      %212 = tpu.matmul %36, %211, %cst_63 {dimension_numbers = #tpu.dot_dimension_numbers<[1], [0], [0], [1], [0, 0, 1, 1], [], []>} : vector<1x32xf32>, vector<32x128xf32>, vector<1x128xf32> -> vector<1x128xf32>
      %213 = arith.index_cast %210 : i32 to index
      %c0_64 = arith.constant 0 : index
      %214 = vector.load %arg7[%213, %c0_64] : memref<8x128xf32, #tpu.memory_space<vmem>>, vector<1x128xf32>
      %215 = vector.extract_strided_slice %212 {offsets = [0, 96], sizes = [1, 32], strides = [1, 1]} : vector<1x128xf32> to vector<1x32xf32>
      %216 = vector.extract_strided_slice %214 {offsets = [0, 96], sizes = [1, 32], strides = [1, 1]} : vector<1x128xf32> to vector<1x32xf32>
      %217 = arith.addf %215, %216 : vector<1x32xf32>
      %218 = arith.negf %217 : vector<1x32xf32>
      %219 = math.exp %218 : vector<1x32xf32>
      %cst_65 = arith.constant 1.000000e+00 : f32
      %220 = vector.broadcast %cst_65 : f32 to vector<1x32xf32>
      %221 = arith.addf %220, %219 : vector<1x32xf32>
      %222 = arith.divf %220, %221 : vector<1x32xf32>
      %223 = vector.extract_strided_slice %212 {offsets = [0, 0], sizes = [1, 96], strides = [1, 1]} : vector<1x128xf32> to vector<1x96xf32>
      %224 = arith.mulf %222, %34 : vector<1x32xf32>
      %225 = tpu.concatenate %223, %224 in 1 : vector<1x96xf32>, vector<1x32xf32> -> vector<1x128xf32>
      %226 = arith.index_cast %210 : i32 to index
      %c0_66 = arith.constant 0 : index
      %227 = vector.load %arg8[%226, %c0_66] : memref<8x128xf32, #tpu.memory_space<vmem>>, vector<1x128xf32>
      %228 = arith.addf %227, %225 : vector<1x128xf32>
      %229 = arith.index_cast %210 : i32 to index
      %c0_67 = arith.constant 0 : index
      %230 = vector.load %arg8[%229, %c0_67] : memref<8x128xf32, #tpu.memory_space<vmem>>, vector<1x128xf32>
      tpu.vector_store %arg8[%229, %c0_67], %228 {strides = array<i32>} : memref<8x128xf32, #tpu.memory_space<vmem>>, vector<1x128xf32>,
    } else {
    }
    %c1_i32 = arith.constant 1 : i32
    %44 = arith.index_cast %c1_i32 : i32 to index
    %c0_20 = arith.constant 0 : index
    %45 = vector.load %arg8[%44, %c0_20] : memref<8x128xf32, #tpu.memory_space<vmem>>, vector<1x128xf32>
    %46 = arith.index_cast %c1_i32 : i32 to index
    %c0_21 = arith.constant 0 : index
    %47 = vector.load %arg7[%46, %c0_21] : memref<8x128xf32, #tpu.memory_space<vmem>>, vector<1x128xf32>
    %48 = vector.extract_strided_slice %47 {offsets = [0, 0], sizes = [1, 96], strides = [1, 1]} : vector<1x128xf32> to vector<1x96xf32>
    %49 = vector.extract_strided_slice %45 {offsets = [0, 0], sizes = [1, 96], strides = [1, 1]} : vector<1x128xf32> to vector<1x96xf32>
    %50 = arith.addf %48, %49 : vector<1x96xf32>
    %51 = vector.extract_strided_slice %50 {offsets = [0, 0], sizes = [1, 32], strides = [1, 1]} : vector<1x96xf32> to vector<1x32xf32>
    %52 = arith.negf %51 : vector<1x32xf32>
    %53 = math.exp %52 : vector<1x32xf32>
    %cst_22 = arith.constant 1.000000e+00 : f32
    %54 = vector.broadcast %cst_22 : f32 to vector<1x32xf32>
    %55 = arith.addf %54, %53 : vector<1x32xf32>
    %56 = arith.divf %54, %55 : vector<1x32xf32>
    %57 = vector.extract_strided_slice %50 {offsets = [0, 32], sizes = [1, 32], strides = [1, 1]} : vector<1x96xf32> to vector<1x32xf32>
    %58 = arith.negf %57 : vector<1x32xf32>
    %59 = math.exp %58 : vector<1x32xf32>
    %cst_23 = arith.constant 1.000000e+00 : f32
    %60 = vector.broadcast %cst_23 : f32 to vector<1x32xf32>
    %61 = arith.addf %60, %59 : vector<1x32xf32>
    %62 = arith.divf %60, %61 : vector<1x32xf32>
    %63 = vector.extract_strided_slice %50 {offsets = [0, 64], sizes = [1, 32], strides = [1, 1]} : vector<1x96xf32> to vector<1x32xf32>
    %64 = math.tanh %63 : vector<1x32xf32>
    %65 = arith.mulf %56, %64 : vector<1x32xf32>
    %66 = vector.extract_strided_slice %45 {offsets = [0, 96], sizes = [1, 32], strides = [1, 1]} : vector<1x128xf32> to vector<1x32xf32>
    %67 = arith.addf %65, %66 : vector<1x32xf32>
    %68 = math.tanh %67 : vector<1x32xf32>
    %69 = arith.mulf %62, %68 : vector<1x32xf32>
    %cst_24 = arith.constant 0.000000e+00 : f32
    %70 = vector.broadcast %cst_24 : f32 to vector<1x64xf32>
    %71 = tpu.concatenate %67, %69, %70 in 1 : vector<1x32xf32>, vector<1x32xf32>, vector<1x64xf32> -> vector<1x128xf32>
    %72 = arith.index_cast %c1_i32 : i32 to index
    %c0_25 = arith.constant 0 : index
    %73 = vector.load %arg6[%72, %c0_25] : memref<8x128xf32, #tpu.memory_space<vmem>>, vector<1x128xf32>
    tpu.vector_store %arg6[%72, %c0_25], %71 {strides = array<i32>} : memref<8x128xf32, #tpu.memory_space<vmem>>, vector<1x128xf32>,
    %c5_i32_26 = arith.constant 5 : i32
    %74 = arith.cmpi slt, %c1_i32, %c5_i32_26 : i32
    %75 = arith.extui %74 : i1 to i32
    %c0_i32_27 = arith.constant 0 : i32
    %76 = arith.cmpi ne, %75, %c0_i32_27 : i32
    scf.if %76 {
      %209 = arith.index_cast %c1_i32 : i32 to index
      %210 = memref.load %arg1[%209] : memref<6xi32, #tpu.memory_space<smem>>
      %c0_61 = arith.constant 0 : index
      %c0_62 = arith.constant 0 : index
      %211 = vector.load %arg4[%c0_61, %c0_62] : memref<32x128xf32, #tpu.memory_space<vmem>>, vector<32x128xf32>
      %cst_63 = arith.constant dense<0.000000e+00> : vector<1x128xf32>
      %212 = tpu.matmul %69, %211, %cst_63 {dimension_numbers = #tpu.dot_dimension_numbers<[1], [0], [0], [1], [0, 0, 1, 1], [], []>} : vector<1x32xf32>, vector<32x128xf32>, vector<1x128xf32> -> vector<1x128xf32>
      %213 = arith.index_cast %210 : i32 to index
      %c0_64 = arith.constant 0 : index
      %214 = vector.load %arg7[%213, %c0_64] : memref<8x128xf32, #tpu.memory_space<vmem>>, vector<1x128xf32>
      %215 = vector.extract_strided_slice %212 {offsets = [0, 96], sizes = [1, 32], strides = [1, 1]} : vector<1x128xf32> to vector<1x32xf32>
      %216 = vector.extract_strided_slice %214 {offsets = [0, 96], sizes = [1, 32], strides = [1, 1]} : vector<1x128xf32> to vector<1x32xf32>
      %217 = arith.addf %215, %216 : vector<1x32xf32>
      %218 = arith.negf %217 : vector<1x32xf32>
      %219 = math.exp %218 : vector<1x32xf32>
      %cst_65 = arith.constant 1.000000e+00 : f32
      %220 = vector.broadcast %cst_65 : f32 to vector<1x32xf32>
      %221 = arith.addf %220, %219 : vector<1x32xf32>
      %222 = arith.divf %220, %221 : vector<1x32xf32>
      %223 = vector.extract_strided_slice %212 {offsets = [0, 0], sizes = [1, 96], strides = [1, 1]} : vector<1x128xf32> to vector<1x96xf32>
      %224 = arith.mulf %222, %67 : vector<1x32xf32>
      %225 = tpu.concatenate %223, %224 in 1 : vector<1x96xf32>, vector<1x32xf32> -> vector<1x128xf32>
      %226 = arith.index_cast %210 : i32 to index
      %c0_66 = arith.constant 0 : index
      %227 = vector.load %arg8[%226, %c0_66] : memref<8x128xf32, #tpu.memory_space<vmem>>, vector<1x128xf32>
      %228 = arith.addf %227, %225 : vector<1x128xf32>
      %229 = arith.index_cast %210 : i32 to index
      %c0_67 = arith.constant 0 : index
      %230 = vector.load %arg8[%229, %c0_67] : memref<8x128xf32, #tpu.memory_space<vmem>>, vector<1x128xf32>
      tpu.vector_store %arg8[%229, %c0_67], %228 {strides = array<i32>} : memref<8x128xf32, #tpu.memory_space<vmem>>, vector<1x128xf32>,
    } else {
    }
    %c2_i32 = arith.constant 2 : i32
    %77 = arith.index_cast %c2_i32 : i32 to index
    %c0_28 = arith.constant 0 : index
    %78 = vector.load %arg8[%77, %c0_28] : memref<8x128xf32, #tpu.memory_space<vmem>>, vector<1x128xf32>
    %79 = arith.index_cast %c2_i32 : i32 to index
    %c0_29 = arith.constant 0 : index
    %80 = vector.load %arg7[%79, %c0_29] : memref<8x128xf32, #tpu.memory_space<vmem>>, vector<1x128xf32>
    %81 = vector.extract_strided_slice %80 {offsets = [0, 0], sizes = [1, 96], strides = [1, 1]} : vector<1x128xf32> to vector<1x96xf32>
    %82 = vector.extract_strided_slice %78 {offsets = [0, 0], sizes = [1, 96], strides = [1, 1]} : vector<1x128xf32> to vector<1x96xf32>
    %83 = arith.addf %81, %82 : vector<1x96xf32>
    %84 = vector.extract_strided_slice %83 {offsets = [0, 0], sizes = [1, 32], strides = [1, 1]} : vector<1x96xf32> to vector<1x32xf32>
    %85 = arith.negf %84 : vector<1x32xf32>
    %86 = math.exp %85 : vector<1x32xf32>
    %cst_30 = arith.constant 1.000000e+00 : f32
    %87 = vector.broadcast %cst_30 : f32 to vector<1x32xf32>
    %88 = arith.addf %87, %86 : vector<1x32xf32>
    %89 = arith.divf %87, %88 : vector<1x32xf32>
    %90 = vector.extract_strided_slice %83 {offsets = [0, 32], sizes = [1, 32], strides = [1, 1]} : vector<1x96xf32> to vector<1x32xf32>
    %91 = arith.negf %90 : vector<1x32xf32>
    %92 = math.exp %91 : vector<1x32xf32>
    %cst_31 = arith.constant 1.000000e+00 : f32
    %93 = vector.broadcast %cst_31 : f32 to vector<1x32xf32>
    %94 = arith.addf %93, %92 : vector<1x32xf32>
    %95 = arith.divf %93, %94 : vector<1x32xf32>
    %96 = vector.extract_strided_slice %83 {offsets = [0, 64], sizes = [1, 32], strides = [1, 1]} : vector<1x96xf32> to vector<1x32xf32>
    %97 = math.tanh %96 : vector<1x32xf32>
    %98 = arith.mulf %89, %97 : vector<1x32xf32>
    %99 = vector.extract_strided_slice %78 {offsets = [0, 96], sizes = [1, 32], strides = [1, 1]} : vector<1x128xf32> to vector<1x32xf32>
    %100 = arith.addf %98, %99 : vector<1x32xf32>
    %101 = math.tanh %100 : vector<1x32xf32>
    %102 = arith.mulf %95, %101 : vector<1x32xf32>
    %cst_32 = arith.constant 0.000000e+00 : f32
    %103 = vector.broadcast %cst_32 : f32 to vector<1x64xf32>
    %104 = tpu.concatenate %100, %102, %103 in 1 : vector<1x32xf32>, vector<1x32xf32>, vector<1x64xf32> -> vector<1x128xf32>
    %105 = arith.index_cast %c2_i32 : i32 to index
    %c0_33 = arith.constant 0 : index
    %106 = vector.load %arg6[%105, %c0_33] : memref<8x128xf32, #tpu.memory_space<vmem>>, vector<1x128xf32>
    tpu.vector_store %arg6[%105, %c0_33], %104 {strides = array<i32>} : memref<8x128xf32, #tpu.memory_space<vmem>>, vector<1x128xf32>,
    %c5_i32_34 = arith.constant 5 : i32
    %107 = arith.cmpi slt, %c2_i32, %c5_i32_34 : i32
    %108 = arith.extui %107 : i1 to i32
    %c0_i32_35 = arith.constant 0 : i32
    %109 = arith.cmpi ne, %108, %c0_i32_35 : i32
    scf.if %109 {
      %209 = arith.index_cast %c2_i32 : i32 to index
      %210 = memref.load %arg1[%209] : memref<6xi32, #tpu.memory_space<smem>>
      %c0_61 = arith.constant 0 : index
      %c0_62 = arith.constant 0 : index
      %211 = vector.load %arg4[%c0_61, %c0_62] : memref<32x128xf32, #tpu.memory_space<vmem>>, vector<32x128xf32>
      %cst_63 = arith.constant dense<0.000000e+00> : vector<1x128xf32>
      %212 = tpu.matmul %102, %211, %cst_63 {dimension_numbers = #tpu.dot_dimension_numbers<[1], [0], [0], [1], [0, 0, 1, 1], [], []>} : vector<1x32xf32>, vector<32x128xf32>, vector<1x128xf32> -> vector<1x128xf32>
      %213 = arith.index_cast %210 : i32 to index
      %c0_64 = arith.constant 0 : index
      %214 = vector.load %arg7[%213, %c0_64] : memref<8x128xf32, #tpu.memory_space<vmem>>, vector<1x128xf32>
      %215 = vector.extract_strided_slice %212 {offsets = [0, 96], sizes = [1, 32], strides = [1, 1]} : vector<1x128xf32> to vector<1x32xf32>
      %216 = vector.extract_strided_slice %214 {offsets = [0, 96], sizes = [1, 32], strides = [1, 1]} : vector<1x128xf32> to vector<1x32xf32>
      %217 = arith.addf %215, %216 : vector<1x32xf32>
      %218 = arith.negf %217 : vector<1x32xf32>
      %219 = math.exp %218 : vector<1x32xf32>
      %cst_65 = arith.constant 1.000000e+00 : f32
      %220 = vector.broadcast %cst_65 : f32 to vector<1x32xf32>
      %221 = arith.addf %220, %219 : vector<1x32xf32>
      %222 = arith.divf %220, %221 : vector<1x32xf32>
      %223 = vector.extract_strided_slice %212 {offsets = [0, 0], sizes = [1, 96], strides = [1, 1]} : vector<1x128xf32> to vector<1x96xf32>
      %224 = arith.mulf %222, %100 : vector<1x32xf32>
      %225 = tpu.concatenate %223, %224 in 1 : vector<1x96xf32>, vector<1x32xf32> -> vector<1x128xf32>
      %226 = arith.index_cast %210 : i32 to index
      %c0_66 = arith.constant 0 : index
      %227 = vector.load %arg8[%226, %c0_66] : memref<8x128xf32, #tpu.memory_space<vmem>>, vector<1x128xf32>
      %228 = arith.addf %227, %225 : vector<1x128xf32>
      %229 = arith.index_cast %210 : i32 to index
      %c0_67 = arith.constant 0 : index
      %230 = vector.load %arg8[%229, %c0_67] : memref<8x128xf32, #tpu.memory_space<vmem>>, vector<1x128xf32>
      tpu.vector_store %arg8[%229, %c0_67], %228 {strides = array<i32>} : memref<8x128xf32, #tpu.memory_space<vmem>>, vector<1x128xf32>,
    } else {
    }
    %c3_i32 = arith.constant 3 : i32
    %110 = arith.index_cast %c3_i32 : i32 to index
    %c0_36 = arith.constant 0 : index
    %111 = vector.load %arg8[%110, %c0_36] : memref<8x128xf32, #tpu.memory_space<vmem>>, vector<1x128xf32>
    %112 = arith.index_cast %c3_i32 : i32 to index
    %c0_37 = arith.constant 0 : index
    %113 = vector.load %arg7[%112, %c0_37] : memref<8x128xf32, #tpu.memory_space<vmem>>, vector<1x128xf32>
    %114 = vector.extract_strided_slice %113 {offsets = [0, 0], sizes = [1, 96], strides = [1, 1]} : vector<1x128xf32> to vector<1x96xf32>
    %115 = vector.extract_strided_slice %111 {offsets = [0, 0], sizes = [1, 96], strides = [1, 1]} : vector<1x128xf32> to vector<1x96xf32>
    %116 = arith.addf %114, %115 : vector<1x96xf32>
    %117 = vector.extract_strided_slice %116 {offsets = [0, 0], sizes = [1, 32], strides = [1, 1]} : vector<1x96xf32> to vector<1x32xf32>
    %118 = arith.negf %117 : vector<1x32xf32>
    %119 = math.exp %118 : vector<1x32xf32>
    %cst_38 = arith.constant 1.000000e+00 : f32
    %120 = vector.broadcast %cst_38 : f32 to vector<1x32xf32>
    %121 = arith.addf %120, %119 : vector<1x32xf32>
    %122 = arith.divf %120, %121 : vector<1x32xf32>
    %123 = vector.extract_strided_slice %116 {offsets = [0, 32], sizes = [1, 32], strides = [1, 1]} : vector<1x96xf32> to vector<1x32xf32>
    %124 = arith.negf %123 : vector<1x32xf32>
    %125 = math.exp %124 : vector<1x32xf32>
    %cst_39 = arith.constant 1.000000e+00 : f32
    %126 = vector.broadcast %cst_39 : f32 to vector<1x32xf32>
    %127 = arith.addf %126, %125 : vector<1x32xf32>
    %128 = arith.divf %126, %127 : vector<1x32xf32>
    %129 = vector.extract_strided_slice %116 {offsets = [0, 64], sizes = [1, 32], strides = [1, 1]} : vector<1x96xf32> to vector<1x32xf32>
    %130 = math.tanh %129 : vector<1x32xf32>
    %131 = arith.mulf %122, %130 : vector<1x32xf32>
    %132 = vector.extract_strided_slice %111 {offsets = [0, 96], sizes = [1, 32], strides = [1, 1]} : vector<1x128xf32> to vector<1x32xf32>
    %133 = arith.addf %131, %132 : vector<1x32xf32>
    %134 = math.tanh %133 : vector<1x32xf32>
    %135 = arith.mulf %128, %134 : vector<1x32xf32>
    %cst_40 = arith.constant 0.000000e+00 : f32
    %136 = vector.broadcast %cst_40 : f32 to vector<1x64xf32>
    %137 = tpu.concatenate %133, %135, %136 in 1 : vector<1x32xf32>, vector<1x32xf32>, vector<1x64xf32> -> vector<1x128xf32>
    %138 = arith.index_cast %c3_i32 : i32 to index
    %c0_41 = arith.constant 0 : index
    %139 = vector.load %arg6[%138, %c0_41] : memref<8x128xf32, #tpu.memory_space<vmem>>, vector<1x128xf32>
    tpu.vector_store %arg6[%138, %c0_41], %137 {strides = array<i32>} : memref<8x128xf32, #tpu.memory_space<vmem>>, vector<1x128xf32>,
    %c5_i32_42 = arith.constant 5 : i32
    %140 = arith.cmpi slt, %c3_i32, %c5_i32_42 : i32
    %141 = arith.extui %140 : i1 to i32
    %c0_i32_43 = arith.constant 0 : i32
    %142 = arith.cmpi ne, %141, %c0_i32_43 : i32
    scf.if %142 {
      %209 = arith.index_cast %c3_i32 : i32 to index
      %210 = memref.load %arg1[%209] : memref<6xi32, #tpu.memory_space<smem>>
      %c0_61 = arith.constant 0 : index
      %c0_62 = arith.constant 0 : index
      %211 = vector.load %arg4[%c0_61, %c0_62] : memref<32x128xf32, #tpu.memory_space<vmem>>, vector<32x128xf32>
      %cst_63 = arith.constant dense<0.000000e+00> : vector<1x128xf32>
      %212 = tpu.matmul %135, %211, %cst_63 {dimension_numbers = #tpu.dot_dimension_numbers<[1], [0], [0], [1], [0, 0, 1, 1], [], []>} : vector<1x32xf32>, vector<32x128xf32>, vector<1x128xf32> -> vector<1x128xf32>
      %213 = arith.index_cast %210 : i32 to index
      %c0_64 = arith.constant 0 : index
      %214 = vector.load %arg7[%213, %c0_64] : memref<8x128xf32, #tpu.memory_space<vmem>>, vector<1x128xf32>
      %215 = vector.extract_strided_slice %212 {offsets = [0, 96], sizes = [1, 32], strides = [1, 1]} : vector<1x128xf32> to vector<1x32xf32>
      %216 = vector.extract_strided_slice %214 {offsets = [0, 96], sizes = [1, 32], strides = [1, 1]} : vector<1x128xf32> to vector<1x32xf32>
      %217 = arith.addf %215, %216 : vector<1x32xf32>
      %218 = arith.negf %217 : vector<1x32xf32>
      %219 = math.exp %218 : vector<1x32xf32>
      %cst_65 = arith.constant 1.000000e+00 : f32
      %220 = vector.broadcast %cst_65 : f32 to vector<1x32xf32>
      %221 = arith.addf %220, %219 : vector<1x32xf32>
      %222 = arith.divf %220, %221 : vector<1x32xf32>
      %223 = vector.extract_strided_slice %212 {offsets = [0, 0], sizes = [1, 96], strides = [1, 1]} : vector<1x128xf32> to vector<1x96xf32>
      %224 = arith.mulf %222, %133 : vector<1x32xf32>
      %225 = tpu.concatenate %223, %224 in 1 : vector<1x96xf32>, vector<1x32xf32> -> vector<1x128xf32>
      %226 = arith.index_cast %210 : i32 to index
      %c0_66 = arith.constant 0 : index
      %227 = vector.load %arg8[%226, %c0_66] : memref<8x128xf32, #tpu.memory_space<vmem>>, vector<1x128xf32>
      %228 = arith.addf %227, %225 : vector<1x128xf32>
      %229 = arith.index_cast %210 : i32 to index
      %c0_67 = arith.constant 0 : index
      %230 = vector.load %arg8[%229, %c0_67] : memref<8x128xf32, #tpu.memory_space<vmem>>, vector<1x128xf32>
      tpu.vector_store %arg8[%229, %c0_67], %228 {strides = array<i32>} : memref<8x128xf32, #tpu.memory_space<vmem>>, vector<1x128xf32>,
    } else {
    }
    %c4_i32 = arith.constant 4 : i32
    %143 = arith.index_cast %c4_i32 : i32 to index
    %c0_44 = arith.constant 0 : index
    %144 = vector.load %arg8[%143, %c0_44] : memref<8x128xf32, #tpu.memory_space<vmem>>, vector<1x128xf32>
    %145 = arith.index_cast %c4_i32 : i32 to index
    %c0_45 = arith.constant 0 : index
    %146 = vector.load %arg7[%145, %c0_45] : memref<8x128xf32, #tpu.memory_space<vmem>>, vector<1x128xf32>
    %147 = vector.extract_strided_slice %146 {offsets = [0, 0], sizes = [1, 96], strides = [1, 1]} : vector<1x128xf32> to vector<1x96xf32>
    %148 = vector.extract_strided_slice %144 {offsets = [0, 0], sizes = [1, 96], strides = [1, 1]} : vector<1x128xf32> to vector<1x96xf32>
    %149 = arith.addf %147, %148 : vector<1x96xf32>
    %150 = vector.extract_strided_slice %149 {offsets = [0, 0], sizes = [1, 32], strides = [1, 1]} : vector<1x96xf32> to vector<1x32xf32>
    %151 = arith.negf %150 : vector<1x32xf32>
    %152 = math.exp %151 : vector<1x32xf32>
    %cst_46 = arith.constant 1.000000e+00 : f32
    %153 = vector.broadcast %cst_46 : f32 to vector<1x32xf32>
    %154 = arith.addf %153, %152 : vector<1x32xf32>
    %155 = arith.divf %153, %154 : vector<1x32xf32>
    %156 = vector.extract_strided_slice %149 {offsets = [0, 32], sizes = [1, 32], strides = [1, 1]} : vector<1x96xf32> to vector<1x32xf32>
    %157 = arith.negf %156 : vector<1x32xf32>
    %158 = math.exp %157 : vector<1x32xf32>
    %cst_47 = arith.constant 1.000000e+00 : f32
    %159 = vector.broadcast %cst_47 : f32 to vector<1x32xf32>
    %160 = arith.addf %159, %158 : vector<1x32xf32>
    %161 = arith.divf %159, %160 : vector<1x32xf32>
    %162 = vector.extract_strided_slice %149 {offsets = [0, 64], sizes = [1, 32], strides = [1, 1]} : vector<1x96xf32> to vector<1x32xf32>
    %163 = math.tanh %162 : vector<1x32xf32>
    %164 = arith.mulf %155, %163 : vector<1x32xf32>
    %165 = vector.extract_strided_slice %144 {offsets = [0, 96], sizes = [1, 32], strides = [1, 1]} : vector<1x128xf32> to vector<1x32xf32>
    %166 = arith.addf %164, %165 : vector<1x32xf32>
    %167 = math.tanh %166 : vector<1x32xf32>
    %168 = arith.mulf %161, %167 : vector<1x32xf32>
    %cst_48 = arith.constant 0.000000e+00 : f32
    %169 = vector.broadcast %cst_48 : f32 to vector<1x64xf32>
    %170 = tpu.concatenate %166, %168, %169 in 1 : vector<1x32xf32>, vector<1x32xf32>, vector<1x64xf32> -> vector<1x128xf32>
    %171 = arith.index_cast %c4_i32 : i32 to index
    %c0_49 = arith.constant 0 : index
    %172 = vector.load %arg6[%171, %c0_49] : memref<8x128xf32, #tpu.memory_space<vmem>>, vector<1x128xf32>
    tpu.vector_store %arg6[%171, %c0_49], %170 {strides = array<i32>} : memref<8x128xf32, #tpu.memory_space<vmem>>, vector<1x128xf32>,
    %c5_i32_50 = arith.constant 5 : i32
    %173 = arith.cmpi slt, %c4_i32, %c5_i32_50 : i32
    %174 = arith.extui %173 : i1 to i32
    %c0_i32_51 = arith.constant 0 : i32
    %175 = arith.cmpi ne, %174, %c0_i32_51 : i32
    scf.if %175 {
      %209 = arith.index_cast %c4_i32 : i32 to index
      %210 = memref.load %arg1[%209] : memref<6xi32, #tpu.memory_space<smem>>
      %c0_61 = arith.constant 0 : index
      %c0_62 = arith.constant 0 : index
      %211 = vector.load %arg4[%c0_61, %c0_62] : memref<32x128xf32, #tpu.memory_space<vmem>>, vector<32x128xf32>
      %cst_63 = arith.constant dense<0.000000e+00> : vector<1x128xf32>
      %212 = tpu.matmul %168, %211, %cst_63 {dimension_numbers = #tpu.dot_dimension_numbers<[1], [0], [0], [1], [0, 0, 1, 1], [], []>} : vector<1x32xf32>, vector<32x128xf32>, vector<1x128xf32> -> vector<1x128xf32>
      %213 = arith.index_cast %210 : i32 to index
      %c0_64 = arith.constant 0 : index
      %214 = vector.load %arg7[%213, %c0_64] : memref<8x128xf32, #tpu.memory_space<vmem>>, vector<1x128xf32>
      %215 = vector.extract_strided_slice %212 {offsets = [0, 96], sizes = [1, 32], strides = [1, 1]} : vector<1x128xf32> to vector<1x32xf32>
      %216 = vector.extract_strided_slice %214 {offsets = [0, 96], sizes = [1, 32], strides = [1, 1]} : vector<1x128xf32> to vector<1x32xf32>
      %217 = arith.addf %215, %216 : vector<1x32xf32>
      %218 = arith.negf %217 : vector<1x32xf32>
      %219 = math.exp %218 : vector<1x32xf32>
      %cst_65 = arith.constant 1.000000e+00 : f32
      %220 = vector.broadcast %cst_65 : f32 to vector<1x32xf32>
      %221 = arith.addf %220, %219 : vector<1x32xf32>
      %222 = arith.divf %220, %221 : vector<1x32xf32>
      %223 = vector.extract_strided_slice %212 {offsets = [0, 0], sizes = [1, 96], strides = [1, 1]} : vector<1x128xf32> to vector<1x96xf32>
      %224 = arith.mulf %222, %166 : vector<1x32xf32>
      %225 = tpu.concatenate %223, %224 in 1 : vector<1x96xf32>, vector<1x32xf32> -> vector<1x128xf32>
      %226 = arith.index_cast %210 : i32 to index
      %c0_66 = arith.constant 0 : index
      %227 = vector.load %arg8[%226, %c0_66] : memref<8x128xf32, #tpu.memory_space<vmem>>, vector<1x128xf32>
      %228 = arith.addf %227, %225 : vector<1x128xf32>
      %229 = arith.index_cast %210 : i32 to index
      %c0_67 = arith.constant 0 : index
      %230 = vector.load %arg8[%229, %c0_67] : memref<8x128xf32, #tpu.memory_space<vmem>>, vector<1x128xf32>
      tpu.vector_store %arg8[%229, %c0_67], %228 {strides = array<i32>} : memref<8x128xf32, #tpu.memory_space<vmem>>, vector<1x128xf32>,
    } else {
    }
    %c5_i32_52 = arith.constant 5 : i32
    %176 = arith.index_cast %c5_i32_52 : i32 to index
    %c0_53 = arith.constant 0 : index
    %177 = vector.load %arg8[%176, %c0_53] : memref<8x128xf32, #tpu.memory_space<vmem>>, vector<1x128xf32>
    %178 = arith.index_cast %c5_i32_52 : i32 to index
    %c0_54 = arith.constant 0 : index
    %179 = vector.load %arg7[%178, %c0_54] : memref<8x128xf32, #tpu.memory_space<vmem>>, vector<1x128xf32>
    %180 = vector.extract_strided_slice %179 {offsets = [0, 0], sizes = [1, 96], strides = [1, 1]} : vector<1x128xf32> to vector<1x96xf32>
    %181 = vector.extract_strided_slice %177 {offsets = [0, 0], sizes = [1, 96], strides = [1, 1]} : vector<1x128xf32> to vector<1x96xf32>
    %182 = arith.addf %180, %181 : vector<1x96xf32>
    %183 = vector.extract_strided_slice %182 {offsets = [0, 0], sizes = [1, 32], strides = [1, 1]} : vector<1x96xf32> to vector<1x32xf32>
    %184 = arith.negf %183 : vector<1x32xf32>
    %185 = math.exp %184 : vector<1x32xf32>
    %cst_55 = arith.constant 1.000000e+00 : f32
    %186 = vector.broadcast %cst_55 : f32 to vector<1x32xf32>
    %187 = arith.addf %186, %185 : vector<1x32xf32>
    %188 = arith.divf %186, %187 : vector<1x32xf32>
    %189 = vector.extract_strided_slice %182 {offsets = [0, 32], sizes = [1, 32], strides = [1, 1]} : vector<1x96xf32> to vector<1x32xf32>
    %190 = arith.negf %189 : vector<1x32xf32>
    %191 = math.exp %190 : vector<1x32xf32>
    %cst_56 = arith.constant 1.000000e+00 : f32
    %192 = vector.broadcast %cst_56 : f32 to vector<1x32xf32>
    %193 = arith.addf %192, %191 : vector<1x32xf32>
    %194 = arith.divf %192, %193 : vector<1x32xf32>
    %195 = vector.extract_strided_slice %182 {offsets = [0, 64], sizes = [1, 32], strides = [1, 1]} : vector<1x96xf32> to vector<1x32xf32>
    %196 = math.tanh %195 : vector<1x32xf32>
    %197 = arith.mulf %188, %196 : vector<1x32xf32>
    %198 = vector.extract_strided_slice %177 {offsets = [0, 96], sizes = [1, 32], strides = [1, 1]} : vector<1x128xf32> to vector<1x32xf32>
    %199 = arith.addf %197, %198 : vector<1x32xf32>
    %200 = math.tanh %199 : vector<1x32xf32>
    %201 = arith.mulf %194, %200 : vector<1x32xf32>
    %cst_57 = arith.constant 0.000000e+00 : f32
    %202 = vector.broadcast %cst_57 : f32 to vector<1x64xf32>
    %203 = tpu.concatenate %199, %201, %202 in 1 : vector<1x32xf32>, vector<1x32xf32>, vector<1x64xf32> -> vector<1x128xf32>
    %204 = arith.index_cast %c5_i32_52 : i32 to index
    %c0_58 = arith.constant 0 : index
    %205 = vector.load %arg6[%204, %c0_58] : memref<8x128xf32, #tpu.memory_space<vmem>>, vector<1x128xf32>
    tpu.vector_store %arg6[%204, %c0_58], %203 {strides = array<i32>} : memref<8x128xf32, #tpu.memory_space<vmem>>, vector<1x128xf32>,
    %c5_i32_59 = arith.constant 5 : i32
    %206 = arith.cmpi slt, %c5_i32_52, %c5_i32_59 : i32
    %207 = arith.extui %206 : i1 to i32
    %c0_i32_60 = arith.constant 0 : i32
    %208 = arith.cmpi ne, %207, %c0_i32_60 : i32
    scf.if %208 {
      %209 = arith.index_cast %c5_i32_52 : i32 to index
      %210 = memref.load %arg1[%209] : memref<6xi32, #tpu.memory_space<smem>>
      %c0_61 = arith.constant 0 : index
      %c0_62 = arith.constant 0 : index
      %211 = vector.load %arg4[%c0_61, %c0_62] : memref<32x128xf32, #tpu.memory_space<vmem>>, vector<32x128xf32>
      %cst_63 = arith.constant dense<0.000000e+00> : vector<1x128xf32>
      %212 = tpu.matmul %201, %211, %cst_63 {dimension_numbers = #tpu.dot_dimension_numbers<[1], [0], [0], [1], [0, 0, 1, 1], [], []>} : vector<1x32xf32>, vector<32x128xf32>, vector<1x128xf32> -> vector<1x128xf32>
      %213 = arith.index_cast %210 : i32 to index
      %c0_64 = arith.constant 0 : index
      %214 = vector.load %arg7[%213, %c0_64] : memref<8x128xf32, #tpu.memory_space<vmem>>, vector<1x128xf32>
      %215 = vector.extract_strided_slice %212 {offsets = [0, 96], sizes = [1, 32], strides = [1, 1]} : vector<1x128xf32> to vector<1x32xf32>
      %216 = vector.extract_strided_slice %214 {offsets = [0, 96], sizes = [1, 32], strides = [1, 1]} : vector<1x128xf32> to vector<1x32xf32>
      %217 = arith.addf %215, %216 : vector<1x32xf32>
      %218 = arith.negf %217 : vector<1x32xf32>
      %219 = math.exp %218 : vector<1x32xf32>
      %cst_65 = arith.constant 1.000000e+00 : f32
      %220 = vector.broadcast %cst_65 : f32 to vector<1x32xf32>
      %221 = arith.addf %220, %219 : vector<1x32xf32>
      %222 = arith.divf %220, %221 : vector<1x32xf32>
      %223 = vector.extract_strided_slice %212 {offsets = [0, 0], sizes = [1, 96], strides = [1, 1]} : vector<1x128xf32> to vector<1x96xf32>
      %224 = arith.mulf %222, %199 : vector<1x32xf32>
      %225 = tpu.concatenate %223, %224 in 1 : vector<1x96xf32>, vector<1x32xf32> -> vector<1x128xf32>
      %226 = arith.index_cast %210 : i32 to index
      %c0_66 = arith.constant 0 : index
      %227 = vector.load %arg8[%226, %c0_66] : memref<8x128xf32, #tpu.memory_space<vmem>>, vector<1x128xf32>
      %228 = arith.addf %227, %225 : vector<1x128xf32>
      %229 = arith.index_cast %210 : i32 to index
      %c0_67 = arith.constant 0 : index
      %230 = vector.load %arg8[%229, %c0_67] : memref<8x128xf32, #tpu.memory_space<vmem>>, vector<1x128xf32>
      tpu.vector_store %arg8[%229, %c0_67], %228 {strides = array<i32>} : memref<8x128xf32, #tpu.memory_space<vmem>>, vector<1x128xf32>,
    } else {
    }
    %c6_i32 = arith.constant 6 : i32
    return
  }
  func.func @transform_0(%arg0: i32, %arg1: memref<6xi32, #tpu.memory_space<smem>>) -> (i32, i32) {
    %c0_i32 = arith.constant 0 : i32
    %c0_i32_0 = arith.constant 0 : i32
    %c0_i32_1 = arith.constant 0 : i32
    return %c0_i32, %c0_i32_0 : i32, i32
  }
  func.func @transform_1(%arg0: i32, %arg1: memref<6xi32, #tpu.memory_space<smem>>) -> (i32, i32) {
    %c0_i32 = arith.constant 0 : i32
    %c0_i32_0 = arith.constant 0 : i32
    %c0_i32_1 = arith.constant 0 : i32
    return %c0_i32, %c0_i32_0 : i32, i32
  }
  func.func @transform_2(%arg0: i32, %arg1: memref<6xi32, #tpu.memory_space<smem>>) -> (i32, i32) {
    %c0_i32 = arith.constant 0 : i32
    %c0_i32_0 = arith.constant 0 : i32
    %c0_i32_1 = arith.constant 0 : i32
    return %c0_i32, %c0_i32_0 : i32, i32
  }
  func.func @transform_3(%arg0: i32, %arg1: memref<6xi32, #tpu.memory_space<smem>>) -> (i32, i32) {
    %c0_i32 = arith.constant 0 : i32
    %c0_i32_0 = arith.constant 0 : i32
    %c0_i32_1 = arith.constant 0 : i32
    return %c0_i32, %c0_i32_0 : i32, i32
  }
  func.func @transform_4(%arg0: i32, %arg1: memref<6xi32, #tpu.memory_space<smem>>) -> (i32, i32) {
    %c0_i32 = arith.constant 0 : i32
    %c0_i32_0 = arith.constant 0 : i32
    %c0_i32_1 = arith.constant 0 : i32
    return %c0_i32, %c0_i32_0 : i32, i32
  }
}

</mosaic_0001>

<llo_original>
// kernel: _run_tree.1
$region0: #{_run_tree.1}
  #allocation0 [shape = 'u32[]', space=smem, size = 0x4, offset = 0x4, fixed_abs, tag = 'smem constant byte address 0x4 - core index']
  #allocation1 [shape = 'u32[144,128]{1,0:T(1,128)}', space=vmem, size = 0x12000, scoped, tag = 'internal scratch']
  #allocation2 [shape = 'f32[8,128]{1,0:T(8,128)}', space=vmem, size = 0x1000, scoped, tag = 'scratch operand']
  #allocation3 [shape = 'f32[8,128]{1,0:T(8,128)}', space=vmem, size = 0x1000, scoped, tag = 'scratch operand']
  #allocation4 [shape = 's32[1]{0}', space=sflag, size = 0x4, scoped, tag = 'scoped memory for _run_tree.1']
  #allocation5 [shape = 'u8[512]{0}', space=smem, size = 0x200, scoped, tag = 'prefetched SMEM operand 0']
  %s0 = inlined_call_operand.hbm [shape: s32[6], index: 0, kind: input, shape index: {}]
  %s1 = inlined_call_operand.hbm [shape: f32[8,32], index: 1, kind: input, shape index: {}]
  %s2 = inlined_call_operand.hbm [shape: f32[32,128], index: 2, kind: input, shape index: {}]
  %s3 = inlined_call_operand.hbm [shape: f32[32,128], index: 3, kind: input, shape index: {}]
  %s4 = inlined_call_operand.vmem [shape: f32[1,128], index: 4, kind: input, shape index: {}]
  %s5 = inlined_call_operand.hbm [shape: f32[8,128], index: 5, kind: output, shape index: {}]
  %s6 = sld [smem:[#allocation0]]
  $region38: #{_run_tree.1} parent=0
    _
  %s8 = ssub.s32 1, %s6
  %s9 = scalar_select 0, %s8, %s6
  %11 = dma.hbm_to_smem %s0, 16, [#allocation5], [#allocation4]
  %12 = dma.done [#allocation4], 16
  %13 = sfence
  $region1: #{_run_tree.1} parent=0
    #allocation6 [shape = 'u8[4096]{0}', space=vmem, size = 0x1000, scoped, tag = 'input window, operand 1, single buffered']
    #allocation7 [shape = 's32[1]{0}', space=sflag, size = 0x4, scoped, tag = 'scoped memory for _run_tree.1']
    #allocation8 [shape = 's32[1]{0}', space=sflag, size = 0x4, scoped, tag = 'scoped memory for _run_tree.1']
    #allocation9 [shape = 'u8[16384]{0}', space=vmem, size = 0x4000, scoped, tag = 'input window, operand 2, single buffered']
    #allocation10 [shape = 's32[1]{0}', space=sflag, size = 0x4, scoped, tag = 'scoped memory for _run_tree.1']
    #allocation11 [shape = 'u8[16384]{0}', space=vmem, size = 0x4000, scoped, tag = 'input window, operand 3, single buffered']
    #allocation12 [shape = 'u8[4096]{0}', space=vmem, size = 0x1000, scoped, tag = 'output window, operand 0, single buffered']
    %14 = vsyncpa [#allocation7], 0
    %15 = vsyncpa [#allocation10], 0
    %16 = vsyncpa [#allocation8], 0
    // Predicated region
    $region2: #{_run_tree.1} parent=1 // pred_check
      _
    $region3: #{_run_tree.1} parent=1 // pred_check_branch
      %18 = sbr.rel (0) target = $region5
    $region4: #{_run_tree.1} parent=1 // pred_region
      %s20 = ssub.s32 128, 128
      %21 = vsyncadd [#allocation7], %s20
      %s23 = sshll.u32 [#allocation6], 4
      %s24 = int_to_ptr.vmem [resolvable:$true] %s23
      %26 = dma.hbm_to_vmem [thread:$0]  %s1, 128, %s24, [#allocation7]
    $region5: #{_run_tree.1} parent=1 // pred_fallthru
      _
    // Predicated region
    $region6: #{_run_tree.1} parent=1 // pred_check
      _
    $region7: #{_run_tree.1} parent=1 // pred_check_branch
      %28 = sbr.rel (0) target = $region9
    $region8: #{_run_tree.1} parent=1 // pred_region
      %s30 = ssub.s32 512, 512
      %31 = vsyncadd [#allocation10], %s30
      %s32 = sshll.u32 [#allocation9], 4
      %s33 = int_to_ptr.vmem [resolvable:$true] %s32
      %38 = dma.hbm_to_vmem [thread:$0]  %s2, 512, %s33, [#allocation10], 128, 128, 8
    $region9: #{_run_tree.1} parent=1 // pred_fallthru
      _
    // Predicated region
    $region10: #{_run_tree.1} parent=1 // pred_check
      _
    $region11: #{_run_tree.1} parent=1 // pred_check_branch
      %40 = sbr.rel (0) target = $region13
    $region12: #{_run_tree.1} parent=1 // pred_region
      %s42 = ssub.s32 512, 512
      %43 = vsyncadd [#allocation10], %s42
      %s44 = sshll.u32 [#allocation11], 4
      %s45 = int_to_ptr.vmem [resolvable:$true] %s44
      %50 = dma.hbm_to_vmem [thread:$0]  %s3, 512, %s45, [#allocation10], 128, 128, 8
    $region13: #{_run_tree.1} parent=1 // pred_fallthru
      _
    // Predicated region
    $region14: #{_run_tree.1} parent=1 // pred_check
      _
    $region15: #{_run_tree.1} parent=1 // pred_check_branch
      %52 = sbr.rel (0) target = $region17
    $region16: #{_run_tree.1} parent=1 // pred_region
      _
    $region17: #{_run_tree.1} parent=1 // pred_fallthru
      _
    // Predicated region
    $region18: #{_run_tree.1} parent=1 // pred_check
      _
    $region19: #{_run_tree.1} parent=1 // pred_check_branch
      %54 = sbr.rel (0) target = $region21
    $region20: #{_run_tree.1} parent=1 // pred_region
      %55 = dma.done [#allocation7], 128
    $region21: #{_run_tree.1} parent=1 // pred_fallthru
      _
    // Predicated region
    $region22: #{_run_tree.1} parent=1 // pred_check
      _
    $region23: #{_run_tree.1} parent=1 // pred_check_branch
      %57 = sbr.rel (0) target = $region25
    $region24: #{_run_tree.1} parent=1 // pred_region
      %58 = dma.done [#allocation10], 512
    $region25: #{_run_tree.1} parent=1 // pred_fallthru
      _
    // Predicated region
    $region26: #{_run_tree.1} parent=1 // pred_check
      _
    $region27: #{_run_tree.1} parent=1 // pred_check_branch
      %60 = sbr.rel (0) target = $region29
    $region28: #{_run_tree.1} parent=1 // pred_region
      %61 = dma.done [#allocation10], 512
    $region29: #{_run_tree.1} parent=1 // pred_fallthru
      _
    %v62 = vld [vmem:[#allocation6] sm:$0xff]
    %v63 = vld [vmem:[#allocation9] sm:$0xff]
    %v64 = vld [vmem:[#allocation9 + $0x8] sm:$0xff]
    %v65 = vld [vmem:[#allocation9 + $0x10] sm:$0xff]
    %v66 = vld [vmem:[#allocation9 + $0x18] sm:$0xff]
    %v67 = vld [vmem:[%s4] sm:$0x1]
    %v69 = vlaneseq
    %v70 = vshrl.u32 %v69, 7
    %v71 = vsub.s32 0, %v70
    %v72 = vrot.slane %v67, %v71
    %vm74 = vcmask 261120
    %v76 = vsel %vm74, %v62, 0
    %78 = vmatprep.subr.mxu0 0.0
    %79 = vmatpush1.msra.mxu0 0.0
    %80 = vmatprep.subr.mxu0 0.0
    %81 = vmatpush1.msra.mxu0 0.0
    %82 = vmatprep.subr.mxu0 0.0
    %83 = vmatpush1.msra.mxu0 0.0
    %84 = vmatprep.subr.mxu0 0.0
    %85 = vmatpush1.msra.mxu0 0.0
    %86 = vmatprep.subr.mxu0 0.0
    %87 = vmatpush1.msra.mxu0 0.0
    %88 = vmatprep.subr.mxu0 0.0
    %89 = vmatpush1.msra.mxu0 0.0
    %90 = vmatprep.subr.mxu0 0.0
    %91 = vmatpush1.msra.mxu0 0.0
    %92 = vmatprep.subr.mxu0 0.0
    %93 = vmatpush1.msra.mxu0 0.0
    %94 = vmatprep.subr.mxu0 0.0
    %95 = vmatpush1.msra.mxu0 0.0
    %96 = vmatprep.subr.mxu0 0.0
    %97 = vmatpush1.msra.mxu0 0.0
    %98 = vmatprep.subr.mxu0 0.0
    %99 = vmatpush1.msra.mxu0 0.0
    %100 = vmatprep.subr.mxu0 0.0
    %101 = vmatpush1.msra.mxu0 0.0
    %102 = vmatprep.subr.mxu0 0.0
    %103 = vmatpush1.msra.mxu0 %v66
    %104 = vmatprep.subr.mxu0 0.0
    %105 = vmatpush1.msra.mxu0 %v65
    %106 = vmatprep.subr.mxu0 0.0
    %107 = vmatpush1.msra.mxu0 %v64
    %108 = vmatprep.subr.mxu0 0.0
    %109 = vmatpush1.msra.mxu0 %v63
    %110 = vmatprep.subr.mxu0 0.0
    %111 = vmatpush2.msra.mxu0 0.0
    %112 = vmatprep.subr.mxu0 0.0
    %113 = vmatpush2.msra.mxu0 0.0
    %114 = vmatprep.subr.mxu0 0.0
    %115 = vmatpush2.msra.mxu0 0.0
    %116 = vmatprep.subr.mxu0 0.0
    %117 = vmatpush2.msra.mxu0 0.0
    %118 = vmatprep.subr.mxu0 0.0
    %119 = vmatpush2.msra.mxu0 0.0
    %120 = vmatprep.subr.mxu0 0.0
    %121 = vmatpush2.msra.mxu0 0.0
    %122 = vmatprep.subr.mxu0 0.0
    %123 = vmatpush2.msra.mxu0 0.0
    %124 = vmatprep.subr.mxu0 0.0
    %125 = vmatpush2.msra.mxu0 0.0
    %126 = vmatprep.subr.mxu0 0.0
    %127 = vmatpush2.msra.mxu0 0.0
    %128 = vmatprep.subr.mxu0 0.0
    %129 = vmatpush2.msra.mxu0 0.0
    %130 = vmatprep.subr.mxu0 0.0
    %131 = vmatpush2.msra.mxu0 0.0
    %132 = vmatprep.subr.mxu0 0.0
    %133 = vmatpush2.msra.mxu0 0.0
    %134 = vmatprep.subr.mxu0 0.0
    %135 = vmatpush2.msra.mxu0 0.0
    %136 = vmatprep.subr.mxu0 0.0
    %137 = vmatpush2.msra.mxu0 0.0
    %138 = vmatprep.subr.mxu0 0.0
    %139 = vmatpush2.msra.mxu0 0.0
    %140 = vmatprep.subr.mxu0 0.0
    %141 = vmatpush2.msra.mxu0 0.0
    %142 = vmatprep.mubr.f32.mxu0 0.0
    %143 = vmatmul.mubr.f32.gmra.mxu0 %v76
    %v144 = vpop.f32.mrf.mxu0
    %v145 = vadd.f32 %v72, %v144
    %v146 = vpop.f32.mrf.mxu0
    %147 = vdwg.mxu0
    %148 = vst [vmem:[#allocation2] sm:$0xff] %v145
    %149 = vst [vmem:[#allocation3] sm:$0xff] 0.0
    %150 = vst [vmem:[#allocation12] sm:$0xff] 0.0
    %v151 = vld [vmem:[#allocation3] sm:$0x1]
    %v152 = vld [vmem:[#allocation2] sm:$0x1]
    %v153 = vadd.f32 %v152, %v151
    %v154 = vxor.u32 %v153, 2147483648
    %v155 = vmul.f32 %v154, 1.442695
    %v156 = vpow.pop %v155
    %v157 = vadd.f32 %v156, 1.0
    %v158 = vrcp.pop %v157
    %v159 = vmul.f32 1.0, %v158
    %v160 = vtanh.pop %v153
    %162 = vrot.lane.b32.xlu0 %v160, 64
    %v163 = vpop.permute.xlu0 %162
    %v165 = vmul.f32 %v159, %v163
    %167 = vrot.lane.b32.xlu0 %v151, 32
    %v168 = vpop.permute.xlu0 %167
    %v170 = vadd.f32 %v165, %v168
    %v171 = vtanh.pop %v170
    %173 = vrot.lane.b32.xlu0 %v171, 32
    %v174 = vpop.permute.xlu0 %173
    %v176 = vmul.f32 %v159, %v174
    %v177 = vsel %vm74, %v170, %v176
    %vm178 = vcmask 523264
    %v179 = vsel %vm178, %v177, 0.0
    %180 = vst [vmem:[#allocation12] sm:$0x1] %v179
    %s181 = sld [smem:[#allocation5]]
    %v182 = vld [vmem:[#allocation11] sm:$0xff]
    %v183 = vld [vmem:[#allocation11 + $0x8] sm:$0xff]
    %v184 = vld [vmem:[#allocation11 + $0x10] sm:$0xff]
    %v185 = vld [vmem:[#allocation11 + $0x18] sm:$0xff]
    %187 = vrot.lane.b32.xlu0 %v176, 96
    %v188 = vpop.permute.xlu0 %187
    %v189 = vsel %vm74, %v188, 0
    %191 = vmatprep.subr.mxu0 0.0
    %192 = vmatpush1.msra.mxu0 0.0
    %193 = vmatprep.subr.mxu0 0.0
    %194 = vmatpush1.msra.mxu0 0.0
    %195 = vmatprep.subr.mxu0 0.0
    %196 = vmatpush1.msra.mxu0 0.0
    %197 = vmatprep.subr.mxu0 0.0
    %198 = vmatpush1.msra.mxu0 0.0
    %199 = vmatprep.subr.mxu0 0.0
    %200 = vmatpush1.msra.mxu0 0.0
    %201 = vmatprep.subr.mxu0 0.0
    %202 = vmatpush1.msra.mxu0 0.0
    %203 = vmatprep.subr.mxu0 0.0
    %204 = vmatpush1.msra.mxu0 0.0
    %205 = vmatprep.subr.mxu0 0.0
    %206 = vmatpush1.msra.mxu0 0.0
    %207 = vmatprep.subr.mxu0 0.0
    %208 = vmatpush1.msra.mxu0 0.0
    %209 = vmatprep.subr.mxu0 0.0
    %210 = vmatpush1.msra.mxu0 0.0
    %211 = vmatprep.subr.mxu0 0.0
    %212 = vmatpush1.msra.mxu0 0.0
    %213 = vmatprep.subr.mxu0 0.0
    %214 = vmatpush1.msra.mxu0 0.0
    %215 = vmatprep.subr.mxu0 0.0
    %216 = vmatpush1.msra.mxu0 %v185
    %217 = vmatprep.subr.mxu0 0.0
    %218 = vmatpush1.msra.mxu0 %v184
    %219 = vmatprep.subr.mxu0 0.0
    %220 = vmatpush1.msra.mxu0 %v183
    %221 = vmatprep.subr.mxu0 0.0
    %222 = vmatpush1.msra.mxu0 %v182
    %223 = vmatprep.subr.mxu0 0.0
    %224 = vmatpush2.msra.mxu0 0.0
    %225 = vmatprep.subr.mxu0 0.0
    %226 = vmatpush2.msra.mxu0 0.0
    %227 = vmatprep.subr.mxu0 0.0
    %228 = vmatpush2.msra.mxu0 0.0
    %229 = vmatprep.subr.mxu0 0.0
    %230 = vmatpush2.msra.mxu0 0.0
    %231 = vmatprep.subr.mxu0 0.0
    %232 = vmatpush2.msra.mxu0 0.0
    %233 = vmatprep.subr.mxu0 0.0
    %234 = vmatpush2.msra.mxu0 0.0
    %235 = vmatprep.subr.mxu0 0.0
    %236 = vmatpush2.msra.mxu0 0.0
    %237 = vmatprep.subr.mxu0 0.0
    %238 = vmatpush2.msra.mxu0 0.0
    %239 = vmatprep.subr.mxu0 0.0
    %240 = vmatpush2.msra.mxu0 0.0
    %241 = vmatprep.subr.mxu0 0.0
    %242 = vmatpush2.msra.mxu0 0.0
    %243 = vmatprep.subr.mxu0 0.0
    %244 = vmatpush2.msra.mxu0 0.0
    %245 = vmatprep.subr.mxu0 0.0
    %246 = vmatpush2.msra.mxu0 0.0
    %247 = vmatprep.subr.mxu0 0.0
    %248 = vmatpush2.msra.mxu0 0.0
    %249 = vmatprep.subr.mxu0 0.0
    %250 = vmatpush2.msra.mxu0 0.0
    %251 = vmatprep.subr.mxu0 0.0
    %252 = vmatpush2.msra.mxu0 0.0
    %253 = vmatprep.subr.mxu0 0.0
    %254 = vmatpush2.msra.mxu0 0.0
    %255 = vmatprep.mubr.f32.mxu0 0.0
    %256 = vmatmul.mubr.f32.gmra.mxu0 %v189
    %v257 = vpop.f32.mrf.mxu0
    %v258 = vadd.f32 0.0, %v257
    %v259 = vpop.f32.mrf.mxu0
    %260 = vdwg.mxu0
    %s261 = scalar_lea.vmem [#allocation2], %s181
    %v262 = vld [vmem:[%s261] sm:$0x1]
    %v263 = vadd.f32 %v258, %v262
    %v264 = vxor.u32 %v263, 2147483648
    %v265 = vmul.f32 %v264, 1.442695
    %v266 = vpow.pop %v265
    %v267 = vadd.f32 %v266, 1.0
    %v268 = vrcp.pop %v267
    %v269 = vmul.f32 1.0, %v268
    %271 = vrot.lane.b32.xlu0 %v170, 96
    %v272 = vpop.permute.xlu0 %271
    %v274 = vmul.f32 %v269, %v272
    %vm275 = vcmask 785408
    %v276 = vsel %vm275, %v258, %v274
    %s277 = scalar_lea.vmem [#allocation3], %s181
    %v278 = vld [vmem:[%s277] sm:$0x1]
    %v279 = vadd.f32 %v278, %v276
    %280 = vst [vmem:[%s277] sm:$0x1] %v279
    %v281 = vld [vmem:[#allocation3 + $0x1] sm:$0x1]
    %v282 = vld [vmem:[#allocation2 + $0x1] sm:$0x1]
    %v283 = vadd.f32 %v282, %v281
    %v284 = vxor.u32 %v283, 2147483648
    %v285 = vmul.f32 %v284, 1.442695
    %v286 = vpow.pop %v285
    %v287 = vadd.f32 %v286, 1.0
    %v288 = vrcp.pop %v287
    %v289 = vmul.f32 1.0, %v288
    %v290 = vtanh.pop %v283
    %292 = vrot.lane.b32.xlu0 %v290, 64
    %v293 = vpop.permute.xlu0 %292
    %v295 = vmul.f32 %v289, %v293
    %297 = vrot.lane.b32.xlu0 %v281, 32
    %v298 = vpop.permute.xlu0 %297
    %v300 = vadd.f32 %v295, %v298
    %v301 = vtanh.pop %v300
    %303 = vrot.lane.b32.xlu0 %v301, 32
    %v304 = vpop.permute.xlu0 %303
    %v306 = vmul.f32 %v289, %v304
    %v307 = vsel %vm74, %v300, %v306
    %v308 = vsel %vm178, %v307, 0.0
    %309 = vst [vmem:[#allocation12 + $0x1] sm:$0x1] %v308
    %s310 = sld [smem:[#allocation5 + $0x1]]
    %v311 = vld [vmem:[#allocation11] sm:$0xff]
    %v312 = vld [vmem:[#allocation11 + $0x8] sm:$0xff]
    %v313 = vld [vmem:[#allocation11 + $0x10] sm:$0xff]
    %v314 = vld [vmem:[#allocation11 + $0x18] sm:$0xff]
    %316 = vrot.lane.b32.xlu0 %v306, 96
    %v317 = vpop.permute.xlu0 %316
    %v318 = vsel %vm74, %v317, 0
    %320 = vmatprep.subr.mxu0 0.0
    %321 = vmatpush1.msra.mxu0 0.0
    %322 = vmatprep.subr.mxu0 0.0
    %323 = vmatpush1.msra.mxu0 0.0
    %324 = vmatprep.subr.mxu0 0.0
    %325 = vmatpush1.msra.mxu0 0.0
    %326 = vmatprep.subr.mxu0 0.0
    %327 = vmatpush1.msra.mxu0 0.0
    %328 = vmatprep.subr.mxu0 0.0
    %329 = vmatpush1.msra.mxu0 0.0
    %330 = vmatprep.subr.mxu0 0.0
    %331 = vmatpush1.msra.mxu0 0.0
    %332 = vmatprep.subr.mxu0 0.0
    %333 = vmatpush1.msra.mxu0 0.0
    %334 = vmatprep.subr.mxu0 0.0
    %335 = vmatpush1.msra.mxu0 0.0
    %336 = vmatprep.subr.mxu0 0.0
    %337 = vmatpush1.msra.mxu0 0.0
    %338 = vmatprep.subr.mxu0 0.0
    %339 = vmatpush1.msra.mxu0 0.0
    %340 = vmatprep.subr.mxu0 0.0
    %341 = vmatpush1.msra.mxu0 0.0
    %342 = vmatprep.subr.mxu0 0.0
    %343 = vmatpush1.msra.mxu0 0.0
    %344 = vmatprep.subr.mxu0 0.0
    %345 = vmatpush1.msra.mxu0 %v314
    %346 = vmatprep.subr.mxu0 0.0
    %347 = vmatpush1.msra.mxu0 %v313
    %348 = vmatprep.subr.mxu0 0.0
    %349 = vmatpush1.msra.mxu0 %v312
    %350 = vmatprep.subr.mxu0 0.0
    %351 = vmatpush1.msra.mxu0 %v311
    %352 = vmatprep.subr.mxu0 0.0
    %353 = vmatpush2.msra.mxu0 0.0
    %354 = vmatprep.subr.mxu0 0.0
    %355 = vmatpush2.msra.mxu0 0.0
    %356 = vmatprep.subr.mxu0 0.0
    %357 = vmatpush2.msra.mxu0 0.0
    %358 = vmatprep.subr.mxu0 0.0
    %359 = vmatpush2.msra.mxu0 0.0
    %360 = vmatprep.subr.mxu0 0.0
    %361 = vmatpush2.msra.mxu0 0.0
    %362 = vmatprep.subr.mxu0 0.0
    %363 = vmatpush2.msra.mxu0 0.0
    %364 = vmatprep.subr.mxu0 0.0
    %365 = vmatpush2.msra.mxu0 0.0
    %366 = vmatprep.subr.mxu0 0.0
    %367 = vmatpush2.msra.mxu0 0.0
    %368 = vmatprep.subr.mxu0 0.0
    %369 = vmatpush2.msra.mxu0 0.0
    %370 = vmatprep.subr.mxu0 0.0
    %371 = vmatpush2.msra.mxu0 0.0
    %372 = vmatprep.subr.mxu0 0.0
    %373 = vmatpush2.msra.mxu0 0.0
    %374 = vmatprep.subr.mxu0 0.0
    %375 = vmatpush2.msra.mxu0 0.0
    %376 = vmatprep.subr.mxu0 0.0
    %377 = vmatpush2.msra.mxu0 0.0
    %378 = vmatprep.subr.mxu0 0.0
    %379 = vmatpush2.msra.mxu0 0.0
    %380 = vmatprep.subr.mxu0 0.0
    %381 = vmatpush2.msra.mxu0 0.0
    %382 = vmatprep.subr.mxu0 0.0
    %383 = vmatpush2.msra.mxu0 0.0
    %384 = vmatprep.mubr.f32.mxu0 0.0
    %385 = vmatmul.mubr.f32.gmra.mxu0 %v318
    %v386 = vpop.f32.mrf.mxu0
    %v387 = vadd.f32 0.0, %v386
    %v388 = vpop.f32.mrf.mxu0
    %389 = vdwg.mxu0
    %s390 = scalar_lea.vmem [#allocation2], %s310
    %v391 = vld [vmem:[%s390] sm:$0x1]
    %v392 = vadd.f32 %v387, %v391
    %v393 = vxor.u32 %v392, 2147483648
    %v394 = vmul.f32 %v393, 1.442695
    %v395 = vpow.pop %v394
    %v396 = vadd.f32 %v395, 1.0
    %v397 = vrcp.pop %v396
    %v398 = vmul.f32 1.0, %v397
    %400 = vrot.lane.b32.xlu0 %v300, 96
    %v401 = vpop.permute.xlu0 %400
    %v403 = vmul.f32 %v398, %v401
    %v404 = vsel %vm275, %v387, %v403
    %s405 = scalar_lea.vmem [#allocation3], %s310
    %v406 = vld [vmem:[%s405] sm:$0x1]
    %v407 = vadd.f32 %v406, %v404
    %408 = vst [vmem:[%s405] sm:$0x1] %v407
    %v409 = vld [vmem:[#allocation3 + $0x2] sm:$0x1]
    %v410 = vld [vmem:[#allocation2 + $0x2] sm:$0x1]
    %v411 = vadd.f32 %v410, %v409
    %v412 = vxor.u32 %v411, 2147483648
    %v413 = vmul.f32 %v412, 1.442695
    %v414 = vpow.pop %v413
    %v415 = vadd.f32 %v414, 1.0
    %v416 = vrcp.pop %v415
    %v417 = vmul.f32 1.0, %v416
    %v418 = vtanh.pop %v411
    %420 = vrot.lane.b32.xlu0 %v418, 64
    %v421 = vpop.permute.xlu0 %420
    %v423 = vmul.f32 %v417, %v421
    %425 = vrot.lane.b32.xlu0 %v409, 32
    %v426 = vpop.permute.xlu0 %425
    %v428 = vadd.f32 %v423, %v426
    %v429 = vtanh.pop %v428
    %431 = vrot.lane.b32.xlu0 %v429, 32
    %v432 = vpop.permute.xlu0 %431
    %v434 = vmul.f32 %v417, %v432
    %v435 = vsel %vm74, %v428, %v434
    %v436 = vsel %vm178, %v435, 0.0
    %437 = vst [vmem:[#allocation12 + $0x2] sm:$0x1] %v436
    %s438 = sld [smem:[#allocation5 + $0x2]]
    %v439 = vld [vmem:[#allocation11] sm:$0xff]
    %v440 = vld [vmem:[#allocation11 + $0x8] sm:$0xff]
    %v441 = vld [vmem:[#allocation11 + $0x10] sm:$0xff]
    %v442 = vld [vmem:[#allocation11 + $0x18] sm:$0xff]
    %444 = vrot.lane.b32.xlu0 %v434, 96
    %v445 = vpop.permute.xlu0 %444
    %v446 = vsel %vm74, %v445, 0
    %448 = vmatprep.subr.mxu0 0.0
    %449 = vmatpush1.msra.mxu0 0.0
    %450 = vmatprep.subr.mxu0 0.0
    %451 = vmatpush1.msra.mxu0 0.0
    %452 = vmatprep.subr.mxu0 0.0
    %453 = vmatpush1.msra.mxu0 0.0
    %454 = vmatprep.subr.mxu0 0.0
    %455 = vmatpush1.msra.mxu0 0.0
    %456 = vmatprep.subr.mxu0 0.0
    %457 = vmatpush1.msra.mxu0 0.0
    %458 = vmatprep.subr.mxu0 0.0
    %459 = vmatpush1.msra.mxu0 0.0
    %460 = vmatprep.subr.mxu0 0.0
    %461 = vmatpush1.msra.mxu0 0.0
    %462 = vmatprep.subr.mxu0 0.0
    %463 = vmatpush1.msra.mxu0 0.0
    %464 = vmatprep.subr.mxu0 0.0
    %465 = vmatpush1.msra.mxu0 0.0
    %466 = vmatprep.subr.mxu0 0.0
    %467 = vmatpush1.msra.mxu0 0.0
    %468 = vmatprep.subr.mxu0 0.0
    %469 = vmatpush1.msra.mxu0 0.0
    %470 = vmatprep.subr.mxu0 0.0
    %471 = vmatpush1.msra.mxu0 0.0
    %472 = vmatprep.subr.mxu0 0.0
    %473 = vmatpush1.msra.mxu0 %v442
    %474 = vmatprep.subr.mxu0 0.0
    %475 = vmatpush1.msra.mxu0 %v441
    %476 = vmatprep.subr.mxu0 0.0
    %477 = vmatpush1.msra.mxu0 %v440
    %478 = vmatprep.subr.mxu0 0.0
    %479 = vmatpush1.msra.mxu0 %v439
    %480 = vmatprep.subr.mxu0 0.0
    %481 = vmatpush2.msra.mxu0 0.0
    %482 = vmatprep.subr.mxu0 0.0
    %483 = vmatpush2.msra.mxu0 0.0
    %484 = vmatprep.subr.mxu0 0.0
    %485 = vmatpush2.msra.mxu0 0.0
    %486 = vmatprep.subr.mxu0 0.0
    %487 = vmatpush2.msra.mxu0 0.0
    %488 = vmatprep.subr.mxu0 0.0
    %489 = vmatpush2.msra.mxu0 0.0
    %490 = vmatprep.subr.mxu0 0.0
    %491 = vmatpush2.msra.mxu0 0.0
    %492 = vmatprep.subr.mxu0 0.0
    %493 = vmatpush2.msra.mxu0 0.0
    %494 = vmatprep.subr.mxu0 0.0
    %495 = vmatpush2.msra.mxu0 0.0
    %496 = vmatprep.subr.mxu0 0.0
    %497 = vmatpush2.msra.mxu0 0.0
    %498 = vmatprep.subr.mxu0 0.0
    %499 = vmatpush2.msra.mxu0 0.0
    %500 = vmatprep.subr.mxu0 0.0
    %501 = vmatpush2.msra.mxu0 0.0
    %502 = vmatprep.subr.mxu0 0.0
    %503 = vmatpush2.msra.mxu0 0.0
    %504 = vmatprep.subr.mxu0 0.0
    %505 = vmatpush2.msra.mxu0 0.0
    %506 = vmatprep.subr.mxu0 0.0
    %507 = vmatpush2.msra.mxu0 0.0
    %508 = vmatprep.subr.mxu0 0.0
    %509 = vmatpush2.msra.mxu0 0.0
    %510 = vmatprep.subr.mxu0 0.0
    %511 = vmatpush2.msra.mxu0 0.0
    %512 = vmatprep.mubr.f32.mxu0 0.0
    %513 = vmatmul.mubr.f32.gmra.mxu0 %v446
    %v514 = vpop.f32.mrf.mxu0
    %v515 = vadd.f32 0.0, %v514
    %v516 = vpop.f32.mrf.mxu0
    %517 = vdwg.mxu0
    %s518 = scalar_lea.vmem [#allocation2], %s438
    %v519 = vld [vmem:[%s518] sm:$0x1]
    %v520 = vadd.f32 %v515, %v519
    %v521 = vxor.u32 %v520, 2147483648
    %v522 = vmul.f32 %v521, 1.442695
    %v523 = vpow.pop %v522
    %v524 = vadd.f32 %v523, 1.0
    %v525 = vrcp.pop %v524
    %v526 = vmul.f32 1.0, %v525
    %528 = vrot.lane.b32.xlu0 %v428, 96
    %v529 = vpop.permute.xlu0 %528
    %v531 = vmul.f32 %v526, %v529
    %v532 = vsel %vm275, %v515, %v531
    %s533 = scalar_lea.vmem [#allocation3], %s438
    %v534 = vld [vmem:[%s533] sm:$0x1]
    %v535 = vadd.f32 %v534, %v532
    %536 = vst [vmem:[%s533] sm:$0x1] %v535
    %v537 = vld [vmem:[#allocation3 + $0x3] sm:$0x1]
    %v538 = vld [vmem:[#allocation2 + $0x3] sm:$0x1]
    %v539 = vadd.f32 %v538, %v537
    %v540 = vxor.u32 %v539, 2147483648
    %v541 = vmul.f32 %v540, 1.442695
    %v542 = vpow.pop %v541
    %v543 = vadd.f32 %v542, 1.0
    %v544 = vrcp.pop %v543
    %v545 = vmul.f32 1.0, %v544
    %v546 = vtanh.pop %v539
    %548 = vrot.lane.b32.xlu0 %v546, 64
    %v549 = vpop.permute.xlu0 %548
    %v551 = vmul.f32 %v545, %v549
    %553 = vrot.lane.b32.xlu0 %v537, 32
    %v554 = vpop.permute.xlu0 %553
    %v556 = vadd.f32 %v551, %v554
    %v557 = vtanh.pop %v556
    %559 = vrot.lane.b32.xlu0 %v557, 32
    %v560 = vpop.permute.xlu0 %559
    %v562 = vmul.f32 %v545, %v560
    %v563 = vsel %vm74, %v556, %v562
    %v564 = vsel %vm178, %v563, 0.0
    %565 = vst [vmem:[#allocation12 + $0x3] sm:$0x1] %v564
    %s566 = sld [smem:[#allocation5 + $0x3]]
    %v567 = vld [vmem:[#allocation11] sm:$0xff]
    %v568 = vld [vmem:[#allocation11 + $0x8] sm:$0xff]
    %v569 = vld [vmem:[#allocation11 + $0x10] sm:$0xff]
    %v570 = vld [vmem:[#allocation11 + $0x18] sm:$0xff]
    %572 = vrot.lane.b32.xlu0 %v562, 96
    %v573 = vpop.permute.xlu0 %572
    %v574 = vsel %vm74, %v573, 0
    %576 = vmatprep.subr.mxu0 0.0
    %577 = vmatpush1.msra.mxu0 0.0
    %578 = vmatprep.subr.mxu0 0.0
    %579 = vmatpush1.msra.mxu0 0.0
    %580 = vmatprep.subr.mxu0 0.0
    %581 = vmatpush1.msra.mxu0 0.0
    %582 = vmatprep.subr.mxu0 0.0
    %583 = vmatpush1.msra.mxu0 0.0
    %584 = vmatprep.subr.mxu0 0.0
    %585 = vmatpush1.msra.mxu0 0.0
    %586 = vmatprep.subr.mxu0 0.0
    %587 = vmatpush1.msra.mxu0 0.0
    %588 = vmatprep.subr.mxu0 0.0
    %589 = vmatpush1.msra.mxu0 0.0
    %590 = vmatprep.subr.mxu0 0.0
    %591 = vmatpush1.msra.mxu0 0.0
    %592 = vmatprep.subr.mxu0 0.0
    %593 = vmatpush1.msra.mxu0 0.0
    %594 = vmatprep.subr.mxu0 0.0
    %595 = vmatpush1.msra.mxu0 0.0
    %596 = vmatprep.subr.mxu0 0.0
    %597 = vmatpush1.msra.mxu0 0.0
    %598 = vmatprep.subr.mxu0 0.0
    %599 = vmatpush1.msra.mxu0 0.0
    %600 = vmatprep.subr.mxu0 0.0
    %601 = vmatpush1.msra.mxu0 %v570
    %602 = vmatprep.subr.mxu0 0.0
    %603 = vmatpush1.msra.mxu0 %v569
    %604 = vmatprep.subr.mxu0 0.0
    %605 = vmatpush1.msra.mxu0 %v568
    %606 = vmatprep.subr.mxu0 0.0
    %607 = vmatpush1.msra.mxu0 %v567
    %608 = vmatprep.subr.mxu0 0.0
    %609 = vmatpush2.msra.mxu0 0.0
    %610 = vmatprep.subr.mxu0 0.0
    %611 = vmatpush2.msra.mxu0 0.0
    %612 = vmatprep.subr.mxu0 0.0
    %613 = vmatpush2.msra.mxu0 0.0
    %614 = vmatprep.subr.mxu0 0.0
    %615 = vmatpush2.msra.mxu0 0.0
    %616 = vmatprep.subr.mxu0 0.0
    %617 = vmatpush2.msra.mxu0 0.0
    %618 = vmatprep.subr.mxu0 0.0
    %619 = vmatpush2.msra.mxu0 0.0
    %620 = vmatprep.subr.mxu0 0.0
    %621 = vmatpush2.msra.mxu0 0.0
    %622 = vmatprep.subr.mxu0 0.0
    %623 = vmatpush2.msra.mxu0 0.0
    %624 = vmatprep.subr.mxu0 0.0
    %625 = vmatpush2.msra.mxu0 0.0
    %626 = vmatprep.subr.mxu0 0.0
    %627 = vmatpush2.msra.mxu0 0.0
    %628 = vmatprep.subr.mxu0 0.0
    %629 = vmatpush2.msra.mxu0 0.0
    %630 = vmatprep.subr.mxu0 0.0
    %631 = vmatpush2.msra.mxu0 0.0
    %632 = vmatprep.subr.mxu0 0.0
    %633 = vmatpush2.msra.mxu0 0.0
    %634 = vmatprep.subr.mxu0 0.0
    %635 = vmatpush2.msra.mxu0 0.0
    %636 = vmatprep.subr.mxu0 0.0
    %637 = vmatpush2.msra.mxu0 0.0
    %638 = vmatprep.subr.mxu0 0.0
    %639 = vmatpush2.msra.mxu0 0.0
    %640 = vmatprep.mubr.f32.mxu0 0.0
    %641 = vmatmul.mubr.f32.gmra.mxu0 %v574
    %v642 = vpop.f32.mrf.mxu0
    %v643 = vadd.f32 0.0, %v642
    %v644 = vpop.f32.mrf.mxu0
    %645 = vdwg.mxu0
    %s646 = scalar_lea.vmem [#allocation2], %s566
    %v647 = vld [vmem:[%s646] sm:$0x1]
    %v648 = vadd.f32 %v643, %v647
    %v649 = vxor.u32 %v648, 2147483648
    %v650 = vmul.f32 %v649, 1.442695
    %v651 = vpow.pop %v650
    %v652 = vadd.f32 %v651, 1.0
    %v653 = vrcp.pop %v652
    %v654 = vmul.f32 1.0, %v653
    %656 = vrot.lane.b32.xlu0 %v556, 96
    %v657 = vpop.permute.xlu0 %656
    %v659 = vmul.f32 %v654, %v657
    %v660 = vsel %vm275, %v643, %v659
    %s661 = scalar_lea.vmem [#allocation3], %s566
    %v662 = vld [vmem:[%s661] sm:$0x1]
    %v663 = vadd.f32 %v662, %v660
    %664 = vst [vmem:[%s661] sm:$0x1] %v663
    %v665 = vld [vmem:[#allocation3 + $0x4] sm:$0x1]
    %v666 = vld [vmem:[#allocation2 + $0x4] sm:$0x1]
    %v667 = vadd.f32 %v666, %v665
    %v668 = vxor.u32 %v667, 2147483648
    %v669 = vmul.f32 %v668, 1.442695
    %v670 = vpow.pop %v669
    %v671 = vadd.f32 %v670, 1.0
    %v672 = vrcp.pop %v671
    %v673 = vmul.f32 1.0, %v672
    %v674 = vtanh.pop %v667
    %676 = vrot.lane.b32.xlu0 %v674, 64
    %v677 = vpop.permute.xlu0 %676
    %v679 = vmul.f32 %v673, %v677
    %681 = vrot.lane.b32.xlu0 %v665, 32
    %v682 = vpop.permute.xlu0 %681
    %v684 = vadd.f32 %v679, %v682
    %v685 = vtanh.pop %v684
    %687 = vrot.lane.b32.xlu0 %v685, 32
    %v688 = vpop.permute.xlu0 %687
    %v690 = vmul.f32 %v673, %v688
    %v691 = vsel %vm74, %v684, %v690
    %v692 = vsel %vm178, %v691, 0.0
    %693 = vst [vmem:[#allocation12 + $0x4] sm:$0x1] %v692
    %s694 = sld [smem:[#allocation5 + $0x4]]
    %v695 = vld [vmem:[#allocation11] sm:$0xff]
    %v696 = vld [vmem:[#allocation11 + $0x8] sm:$0xff]
    %v697 = vld [vmem:[#allocation11 + $0x10] sm:$0xff]
    %v698 = vld [vmem:[#allocation11 + $0x18] sm:$0xff]
    %700 = vrot.lane.b32.xlu0 %v690, 96
    %v701 = vpop.permute.xlu0 %700
    %v702 = vsel %vm74, %v701, 0
    %704 = vmatprep.subr.mxu0 0.0
    %705 = vmatpush1.msra.mxu0 0.0
    %706 = vmatprep.subr.mxu0 0.0
    %707 = vmatpush1.msra.mxu0 0.0
    %708 = vmatprep.subr.mxu0 0.0
    %709 = vmatpush1.msra.mxu0 0.0
    %710 = vmatprep.subr.mxu0 0.0
    %711 = vmatpush1.msra.mxu0 0.0
    %712 = vmatprep.subr.mxu0 0.0
    %713 = vmatpush1.msra.mxu0 0.0
    %714 = vmatprep.subr.mxu0 0.0
    %715 = vmatpush1.msra.mxu0 0.0
    %716 = vmatprep.subr.mxu0 0.0
    %717 = vmatpush1.msra.mxu0 0.0
    %718 = vmatprep.subr.mxu0 0.0
    %719 = vmatpush1.msra.mxu0 0.0
    %720 = vmatprep.subr.mxu0 0.0
    %721 = vmatpush1.msra.mxu0 0.0
    %722 = vmatprep.subr.mxu0 0.0
    %723 = vmatpush1.msra.mxu0 0.0
    %724 = vmatprep.subr.mxu0 0.0
    %725 = vmatpush1.msra.mxu0 0.0
    %726 = vmatprep.subr.mxu0 0.0
    %727 = vmatpush1.msra.mxu0 0.0
    %728 = vmatprep.subr.mxu0 0.0
    %729 = vmatpush1.msra.mxu0 %v698
    %730 = vmatprep.subr.mxu0 0.0
    %731 = vmatpush1.msra.mxu0 %v697
    %732 = vmatprep.subr.mxu0 0.0
    %733 = vmatpush1.msra.mxu0 %v696
    %734 = vmatprep.subr.mxu0 0.0
    %735 = vmatpush1.msra.mxu0 %v695
    %736 = vmatprep.subr.mxu0 0.0
    %737 = vmatpush2.msra.mxu0 0.0
    %738 = vmatprep.subr.mxu0 0.0
    %739 = vmatpush2.msra.mxu0 0.0
    %740 = vmatprep.subr.mxu0 0.0
    %741 = vmatpush2.msra.mxu0 0.0
    %742 = vmatprep.subr.mxu0 0.0
    %743 = vmatpush2.msra.mxu0 0.0
    %744 = vmatprep.subr.mxu0 0.0
    %745 = vmatpush2.msra.mxu0 0.0
    %746 = vmatprep.subr.mxu0 0.0
    %747 = vmatpush2.msra.mxu0 0.0
    %748 = vmatprep.subr.mxu0 0.0
    %749 = vmatpush2.msra.mxu0 0.0
    %750 = vmatprep.subr.mxu0 0.0
    %751 = vmatpush2.msra.mxu0 0.0
    %752 = vmatprep.subr.mxu0 0.0
    %753 = vmatpush2.msra.mxu0 0.0
    %754 = vmatprep.subr.mxu0 0.0
    %755 = vmatpush2.msra.mxu0 0.0
    %756 = vmatprep.subr.mxu0 0.0
    %757 = vmatpush2.msra.mxu0 0.0
    %758 = vmatprep.subr.mxu0 0.0
    %759 = vmatpush2.msra.mxu0 0.0
    %760 = vmatprep.subr.mxu0 0.0
    %761 = vmatpush2.msra.mxu0 0.0
    %762 = vmatprep.subr.mxu0 0.0
    %763 = vmatpush2.msra.mxu0 0.0
    %764 = vmatprep.subr.mxu0 0.0
    %765 = vmatpush2.msra.mxu0 0.0
    %766 = vmatprep.subr.mxu0 0.0
    %767 = vmatpush2.msra.mxu0 0.0
    %768 = vmatprep.mubr.f32.mxu0 0.0
    %769 = vmatmul.mubr.f32.gmra.mxu0 %v702
    %v770 = vpop.f32.mrf.mxu0
    %v771 = vadd.f32 0.0, %v770
    %v772 = vpop.f32.mrf.mxu0
    %773 = vdwg.mxu0
    %s774 = scalar_lea.vmem [#allocation2], %s694
    %v775 = vld [vmem:[%s774] sm:$0x1]
    %v776 = vadd.f32 %v771, %v775
    %v777 = vxor.u32 %v776, 2147483648
    %v778 = vmul.f32 %v777, 1.442695
    %v779 = vpow.pop %v778
    %v780 = vadd.f32 %v779, 1.0
    %v781 = vrcp.pop %v780
    %v782 = vmul.f32 1.0, %v781
    %784 = vrot.lane.b32.xlu0 %v684, 96
    %v785 = vpop.permute.xlu0 %784
    %v787 = vmul.f32 %v782, %v785
    %v788 = vsel %vm275, %v771, %v787
    %s789 = scalar_lea.vmem [#allocation3], %s694
    %v790 = vld [vmem:[%s789] sm:$0x1]
    %v791 = vadd.f32 %v790, %v788
    %792 = vst [vmem:[%s789] sm:$0x1] %v791
    %v793 = vld [vmem:[#allocation3 + $0x5] sm:$0x1]
    %v794 = vld [vmem:[#allocation2 + $0x5] sm:$0x1]
    %v795 = vadd.f32 %v794, %v793
    %v796 = vxor.u32 %v795, 2147483648
    %v797 = vmul.f32 %v796, 1.442695
    %v798 = vpow.pop %v797
    %v799 = vadd.f32 %v798, 1.0
    %v800 = vrcp.pop %v799
    %v801 = vmul.f32 1.0, %v800
    %v802 = vtanh.pop %v795
    %804 = vrot.lane.b32.xlu0 %v802, 64
    %v805 = vpop.permute.xlu0 %804
    %v807 = vmul.f32 %v801, %v805
    %809 = vrot.lane.b32.xlu0 %v793, 32
    %v810 = vpop.permute.xlu0 %809
    %v812 = vadd.f32 %v807, %v810
    %v813 = vtanh.pop %v812
    %815 = vrot.lane.b32.xlu0 %v813, 32
    %v816 = vpop.permute.xlu0 %815
    %v818 = vmul.f32 %v801, %v816
    %v819 = vsel %vm74, %v812, %v818
    %v820 = vsel %vm178, %v819, 0.0
    %821 = vst [vmem:[#allocation12 + $0x5] sm:$0x1] %v820
    // Predicated region
    $region30: #{_run_tree.1} parent=1 // pred_check
      _
    $region31: #{_run_tree.1} parent=1 // pred_check_branch
      %823 = sbr.rel (0) target = $region33
    $region32: #{_run_tree.1} parent=1 // pred_region
      %s825 = ssub.s32 128, 128
      %826 = vsyncadd [#allocation8], %s825
      %s828 = sshll.u32 [#allocation12], 4
      %s829 = int_to_ptr.vmem [resolvable:$true] %s828
      %831 = dma.vmem_to_hbm [thread:$0]  %s829, 128, %s5, [#allocation8]
    $region33: #{_run_tree.1} parent=1 // pred_fallthru
      _
    // Predicated region
    $region34: #{_run_tree.1} parent=1 // pred_check
      _
    $region35: #{_run_tree.1} parent=1 // pred_check_branch
      %833 = sbr.rel (0) target = $region37
    $region36: #{_run_tree.1} parent=1 // pred_region
      %834 = dma.done [#allocation8], 128
    $region37: #{_run_tree.1} parent=1 // pred_fallthru
      _
    %835 = vsyncpa [#allocation7], 1
    %836 = vsyncpa [#allocation10], 1
    %837 = vsyncpa [#allocation8], 1

</llo_original>
